<compile_context>
chip_gen: v7x
topology: tpu7x:2x2x1
jax: 0.10.0
libtpu: 0.0.40
codegen_flags: <defaults>
</compile_context>

<pallas_src>
import functools

import numpy as np

import jax
import jax.numpy as jnp
from jax import lax
from jax.experimental import pallas as pl
from jax.experimental.pallas import tpu as pltpu


def _asm_kernel(inter, q, inv_hw,
                lc_ref, xcf_ref, xcl_ref, gc_ref,
                wtpg_ref, btpg_ref, spool_ref,
                wW_ref, sW_ref, tW_ref, w1_ref, w2_ref,
                out_ref):
    x_cl = xcl_ref[0]          # (HW, Cin)  channel-last, for the 1x1-conv matmuls
    x_cf = xcf_ref[0]          # (Cin, HW)  channel-first (lane-dense), for the residual

    # ---- fused theta / phi / g 1x1 convs: ONE MXU matmul -------------------
    tpg = jnp.dot(x_cl, wtpg_ref[...],
                  preferred_element_type=jnp.float32) + btpg_ref[...]   # (HW, 3*inter)
    theta_x = tpg[:, :inter]                                            # (HW, inter)
    pg = tpg[:, inter:]                                                 # (HW, 2*inter) = [phi | g]

    # ---- MaxPool2d(2,2) on phi & g over the flattened spatial axis ---------
    # A constant 0/1 selection matmul gathers the 4 window corners for every
    # pooled position (stacked in 4 blocks of q rows); then 3 elementwise maxes.
    sel = jnp.dot(spool_ref[...], pg, preferred_element_type=jnp.float32)  # (4q, 2*inter)
    pooled = jnp.maximum(jnp.maximum(sel[0:q], sel[q:2 * q]),
                         jnp.maximum(sel[2 * q:3 * q], sel[3 * q:4 * q]))  # (q, 2*inter)
    phi_p = pooled[:, :inter]                                              # (q, inter)
    g_p = pooled[:, inter:]                                                # (q, inter)

    # ---- non-local attention ------------------------------------------------
    f = lax.dot_general(theta_x, phi_p, (((1,), (1,)), ((), ())),
                        preferred_element_type=jnp.float32)                # (HW, q)
    f = f - jnp.max(f, axis=-1, keepdims=True)
    e = jnp.exp(f)
    fsm = e / jnp.sum(e, axis=-1, keepdims=True)                           # softmax (lanes)
    y = jnp.dot(fsm, g_p, preferred_element_type=jnp.float32)              # (HW, inter)

    # ---- W branch: 1x1 conv inter->Cin + folded BN, channel-first ----------
    wy = lax.dot_general(wW_ref[...], y, (((1,), (1,)), ((), ())),
                         preferred_element_type=jnp.float32)               # (Cin, HW)
    z = wy * sW_ref[...] + tW_ref[...] + x_cf                              # residual

    # ---- concat [lc, z, gc] along channels (sublane axis) -> lane-dense ----
    cat = jnp.concatenate([lc_ref[0], z, gc_ref[0]], axis=0)               # (all_ch, HW)

    # ---- SE layer -----------------------------------------------------------
    pool_c = jnp.sum(cat, axis=1, keepdims=True) * inv_hw                  # (all_ch, 1)
    h1 = jnp.maximum(jnp.dot(w1_ref[...], pool_c,
                             preferred_element_type=jnp.float32), 0.0)     # (hidden, 1)
    se = jax.nn.sigmoid(jnp.dot(w2_ref[...], h1,
                                preferred_element_type=jnp.float32))       # (all_ch, 1)

    out_ref[0] = cat * se                                                  # (all_ch, HW)


def asm_forward(lc, fuse, gc, params, eps=1e-5):
    """ASM forward. lc:(B,Clc,H,W), fuse:(B,Cin,H,W), gc:(B,Cgc,H,W) -> (B,all_ch,H,W)."""
    lc = lc.astype(jnp.float32)
    fuse = fuse.astype(jnp.float32)
    gc = gc.astype(jnp.float32)

    B, Cin, H, W = fuse.shape
    C_lc, C_gc = lc.shape[1], gc.shape[1]
    HW = H * W
    q = (H // 2) * (W // 2)
    inter = params['theta_w'].shape[0]
    all_ch = C_lc + Cin + C_gc

    # channel-first flattened inputs (pure reshapes of NCHW -> lane-dense in kernel)
    lc_cf = lc.reshape(B, C_lc, HW)
    gc_cf = gc.reshape(B, C_gc, HW)
    x_cf = fuse.reshape(B, Cin, HW)
    x_cl = jnp.transpose(x_cf, (0, 2, 1))                 # (B, HW, Cin) for the matmuls

    # fuse theta/phi/g weights into one (Cin, 3*inter) matmul operand
    w_tpg = jnp.concatenate(
        [params['theta_w'].T, params['phi_w'].T, params['g_w'].T], axis=1)
    b_tpg = jnp.concatenate(
        [params['theta_b'], params['phi_b'], params['g_b']]).reshape(1, 3 * inter)

    # fold W-branch conv bias + BatchNorm (inference stats) into scale/bias columns
    sW = (params['bn_gamma'] / jnp.sqrt(params['bn_var'] + eps)).reshape(Cin, 1)
    tW = ((params['W_b'] - params['bn_mean']) * sW[:, 0]
          + params['bn_beta']).reshape(Cin, 1)

    # constant 0/1 selection matrix for the 2x2 maxpool corner gather
    S = np.zeros((4 * q, HW), np.float32)
    pidx = np.arange(q)
    ii, jj = pidx // (W // 2), pidx % (W // 2)
    base = (2 * ii) * W + 2 * jj
    S[pidx, base] = 1.0
    S[q + pidx, base + 1] = 1.0
    S[2 * q + pidx, base + W] = 1.0
    S[3 * q + pidx, base + W + 1] = 1.0
    S = jnp.asarray(S)

    operands = (lc_cf, x_cf, x_cl, gc_cf,
                w_tpg, b_tpg, S,
                params['W_w'], sW, tW,
                params['se_w1'], params['se_w2'])

    def batch_spec(c, n):
        return pl.BlockSpec((1, c, n), lambda b: (b, 0, 0))

    def full_spec(a):
        return pl.BlockSpec(a.shape, lambda b, nd=a.ndim: (0,) * nd)

    in_specs = [batch_spec(C_lc, HW),
                batch_spec(Cin, HW),
                pl.BlockSpec((1, HW, Cin), lambda b: (b, 0, 0)),
                batch_spec(C_gc, HW)]
    in_specs += [full_spec(a) for a in operands[4:]]

    kern = functools.partial(_asm_kernel, inter, q, 1.0 / HW)
    out = pl.pallas_call(
        kern,
        out_shape=jax.ShapeDtypeStruct((B, all_ch, HW), jnp.float32),
        grid=(B,),
        in_specs=in_specs,
        out_specs=pl.BlockSpec((1, all_ch, HW), lambda b: (b, 0, 0)),
        compiler_params=pltpu.CompilerParams(
            dimension_semantics=("parallel",)),   # batches independent -> 2 TCs on v7x
    )(*operands)
    return out.reshape(B, all_ch, H, W)           # channel-first output == NCHW, free reshape


def init_params(key, cin, c_lc, c_gc, reduction=16):
    """Synthetic parameters (f32).  NOTE: PyTorch inits the W-branch BN weight/bias
    to 0 (which would zero W_y); random values are used here so the numeric
    check exercises the full path.  BN is inference-mode (running stats)."""
    all_ch = c_lc + cin + c_gc
    inter = max(cin // 2, 1)
    hidden = all_ch // reduction
    ks = iter(jax.random.split(key, 16))

    def nrm(shape, s=0.3):
        return s * jax.random.normal(next(ks), shape, dtype=jnp.float32)

    return {
        'theta_w': nrm((inter, cin)), 'theta_b': nrm((inter,)),
        'phi_w': nrm((inter, cin)), 'phi_b': nrm((inter,)),
        'g_w': nrm((inter, cin)), 'g_b': nrm((inter,)),
        'W_w': nrm((cin, inter)), 'W_b': nrm((cin,)),
        'bn_gamma': 1.0 + nrm((cin,), 0.1), 'bn_beta': nrm((cin,), 0.1),
        'bn_mean': nrm((cin,), 0.1), 'bn_var': 1.0 + jnp.abs(nrm((cin,), 0.1)),
        'se_w1': nrm((hidden, all_ch)), 'se_w2': nrm((all_ch, hidden)),
    }


def asm_reference(lc, fuse, gc, p, eps=1e-5):
    """Pure-JAX reference mirroring the PyTorch forward (NCHW)."""
    hi = lax.Precision.HIGHEST
    lc = lc.astype(jnp.float32)
    fuse = fuse.astype(jnp.float32)
    gc = gc.astype(jnp.float32)
    B, Cin, H, W = fuse.shape
    inter = p['theta_w'].shape[0]

    def conv1x1(x, w, b):
        return jnp.einsum('bchw,oc->bohw', x, w, precision=hi) + b[None, :, None, None]

    def maxpool2(x):
        b, c, h, w = x.shape
        return x.reshape(b, c, h // 2, 2, w // 2, 2).max(axis=(3, 5))

    g_x = maxpool2(conv1x1(fuse, p['g_w'], p['g_b'])).reshape(B, inter, -1)
    g_x = jnp.transpose(g_x, (0, 2, 1))
    theta_x = conv1x1(fuse, p['theta_w'], p['theta_b']).reshape(B, inter, -1)
    theta_x = jnp.transpose(theta_x, (0, 2, 1))
    phi_x = maxpool2(conv1x1(fuse, p['phi_w'], p['phi_b'])).reshape(B, inter, -1)

    f = jnp.einsum('bij,bjk->bik', theta_x, phi_x, precision=hi)
    fsm = jax.nn.softmax(f, axis=-1)
    y = jnp.einsum('bij,bjk->bik', fsm, g_x, precision=hi)          # (B, HW, inter)
    y = jnp.transpose(y, (0, 2, 1)).reshape(B, inter, H, W)

    wy = conv1x1(y, p['W_w'], p['W_b'])
    wy = ((wy - p['bn_mean'][None, :, None, None])
          / jnp.sqrt(p['bn_var'][None, :, None, None] + eps)
          * p['bn_gamma'][None, :, None, None] + p['bn_beta'][None, :, None, None])
    z = wy + fuse

    cat = jnp.concatenate([lc, z, gc], axis=1)
    pooled = cat.mean(axis=(2, 3))                                   # (B, all_ch)
    h = jnp.maximum(jnp.dot(pooled, p['se_w1'].T, precision=hi), 0.0)
    s = jax.nn.sigmoid(jnp.dot(h, p['se_w2'].T, precision=hi))
    return cat * s[:, :, None, None]


if __name__ == "__main__":
    key = jax.random.PRNGKey(0)
    k1, k2, k3, kw = jax.random.split(key, 4)

    B, Cin, C_lc, C_gc, H, W = 2, 8, 8, 16, 16, 16
    lc = jax.random.normal(k1, (B, C_lc, H, W), dtype=jnp.float32)
    fuse = jax.random.normal(k2, (B, Cin, H, W), dtype=jnp.float32)
    gc = jax.random.normal(k3, (B, C_gc, H, W), dtype=jnp.float32)
    params = init_params(kw, Cin, C_lc, C_gc)

    out = asm_forward(lc, fuse, gc, params)
    jax.block_until_ready(out)

    ref = asm_reference(lc, fuse, gc, params)
    err = float(jnp.max(jnp.abs(out - ref)))
    assert out.shape == (B, C_lc + Cin + C_gc, H, W)
    assert jnp.allclose(out, ref, rtol=1e-3, atol=1e-3), f"max abs err = {err}"

    print("KERNEL_OK")
</pallas_src>

<mosaic_0001>
module attributes {stable_mosaic.version = 11 : i64} {
  func.func @_asm_kernel(%arg0: i32, %arg1: memref<1x8x256xf32, #tpu.memory_space<vmem>>, %arg2: memref<1x8x256xf32, #tpu.memory_space<vmem>>, %arg3: memref<1x256x8xf32, #tpu.memory_space<vmem>>, %arg4: memref<1x16x256xf32, #tpu.memory_space<vmem>>, %arg5: memref<8x12xf32, #tpu.memory_space<vmem>>, %arg6: memref<1x12xf32, #tpu.memory_space<vmem>>, %arg7: memref<256x256xf32, #tpu.memory_space<vmem>>, %arg8: memref<8x4xf32, #tpu.memory_space<vmem>>, %arg9: memref<8x1xf32, #tpu.memory_space<vmem>>, %arg10: memref<8x1xf32, #tpu.memory_space<vmem>>, %arg11: memref<2x32xf32, #tpu.memory_space<vmem>>, %arg12: memref<32x2xf32, #tpu.memory_space<vmem>>, %arg13: memref<1x32x256xf32, #tpu.memory_space<vmem>>) attributes {dimension_semantics = [#tpu.dimension_semantics<parallel>], iteration_bounds = array<i64: 2>, scalar_prefetch = 0 : i64, scratch_operands = 0 : i64, tpu.core_type = #tpu.core_type<tc>, window_params = [{transform_indices = @transform_0, window_bounds = array<i64: 1, 8, 256>}, {transform_indices = @transform_1, window_bounds = array<i64: 1, 8, 256>}, {transform_indices = @transform_2, window_bounds = array<i64: 1, 256, 8>}, {transform_indices = @transform_3, window_bounds = array<i64: 1, 16, 256>}, {pipeline_mode = #tpu.pipeline_mode<synchronous>, transform_indices = @transform_4, window_bounds = array<i64: 8, 12>}, {pipeline_mode = #tpu.pipeline_mode<synchronous>, transform_indices = @transform_5, window_bounds = array<i64: 1, 12>}, {pipeline_mode = #tpu.pipeline_mode<synchronous>, transform_indices = @transform_6, window_bounds = array<i64: 256, 256>}, {pipeline_mode = #tpu.pipeline_mode<synchronous>, transform_indices = @transform_7, window_bounds = array<i64: 8, 4>}, {pipeline_mode = #tpu.pipeline_mode<synchronous>, transform_indices = @transform_8, window_bounds = array<i64: 8, 1>}, {pipeline_mode = #tpu.pipeline_mode<synchronous>, transform_indices = @transform_9, window_bounds = array<i64: 8, 1>}, {pipeline_mode = #tpu.pipeline_mode<synchronous>, transform_indices = @transform_10, window_bounds = array<i64: 2, 32>}, {pipeline_mode = #tpu.pipeline_mode<synchronous>, transform_indices = @transform_11, window_bounds = array<i64: 32, 2>}, {transform_indices = @transform_12, window_bounds = array<i64: 1, 32, 256>}]} {
    %c0 = arith.constant 0 : index
    %c0_0 = arith.constant 0 : index
    %c0_1 = arith.constant 0 : index
    %0 = vector.load %arg3[%c0, %c0_0, %c0_1] : memref<1x256x8xf32, #tpu.memory_space<vmem>>, vector<1x256x8xf32>
    %1 = vector.shape_cast %0 : vector<1x256x8xf32> to vector<256x8xf32>
    %c0_2 = arith.constant 0 : index
    %c0_3 = arith.constant 0 : index
    %c0_4 = arith.constant 0 : index
    %2 = vector.load %arg2[%c0_2, %c0_3, %c0_4] : memref<1x8x256xf32, #tpu.memory_space<vmem>>, vector<1x8x256xf32>
    %3 = vector.shape_cast %2 : vector<1x8x256xf32> to vector<8x256xf32>
    %c0_5 = arith.constant 0 : index
    %c0_6 = arith.constant 0 : index
    %4 = vector.load %arg5[%c0_5, %c0_6] : memref<8x12xf32, #tpu.memory_space<vmem>>, vector<8x12xf32>
    %cst = arith.constant dense<0.000000e+00> : vector<256x12xf32>
    %5 = tpu.matmul %1, %4, %cst {dimension_numbers = #tpu.dot_dimension_numbers<[1], [0], [0], [1], [0, 0, 1, 1], [], []>} : vector<256x8xf32>, vector<8x12xf32>, vector<256x12xf32> -> vector<256x12xf32>
    %c0_7 = arith.constant 0 : index
    %c0_8 = arith.constant 0 : index
    %6 = vector.load %arg6[%c0_7, %c0_8] : memref<1x12xf32, #tpu.memory_space<vmem>>, vector<1x12xf32>
    %7 = vector.broadcast %6 : vector<1x12xf32> to vector<256x12xf32>
    %8 = arith.addf %5, %7 : vector<256x12xf32>
    %9 = vector.extract_strided_slice %8 {offsets = [0, 0], sizes = [256, 4], strides = [1, 1]} : vector<256x12xf32> to vector<256x4xf32>
    %10 = vector.extract_strided_slice %8 {offsets = [0, 4], sizes = [256, 8], strides = [1, 1]} : vector<256x12xf32> to vector<256x8xf32>
    %c0_9 = arith.constant 0 : index
    %c0_10 = arith.constant 0 : index
    %11 = vector.load %arg7[%c0_9, %c0_10] : memref<256x256xf32, #tpu.memory_space<vmem>>, vector<256x256xf32>
    %cst_11 = arith.constant dense<0.000000e+00> : vector<256x8xf32>
    %12 = tpu.matmul %11, %10, %cst_11 {dimension_numbers = #tpu.dot_dimension_numbers<[1], [0], [0], [1], [0, 0, 1, 1], [], []>} : vector<256x256xf32>, vector<256x8xf32>, vector<256x8xf32> -> vector<256x8xf32>
    %13 = vector.extract_strided_slice %12 {offsets = [0, 0], sizes = [64, 8], strides = [1, 1]} : vector<256x8xf32> to vector<64x8xf32>
    %14 = vector.extract_strided_slice %12 {offsets = [64, 0], sizes = [64, 8], strides = [1, 1]} : vector<256x8xf32> to vector<64x8xf32>
    %15 = arith.maximumf %13, %14 : vector<64x8xf32>
    %16 = vector.extract_strided_slice %12 {offsets = [128, 0], sizes = [64, 8], strides = [1, 1]} : vector<256x8xf32> to vector<64x8xf32>
    %17 = vector.extract_strided_slice %12 {offsets = [192, 0], sizes = [64, 8], strides = [1, 1]} : vector<256x8xf32> to vector<64x8xf32>
    %18 = arith.maximumf %16, %17 : vector<64x8xf32>
    %19 = arith.maximumf %15, %18 : vector<64x8xf32>
    %20 = vector.extract_strided_slice %19 {offsets = [0, 0], sizes = [64, 4], strides = [1, 1]} : vector<64x8xf32> to vector<64x4xf32>
    %21 = vector.extract_strided_slice %19 {offsets = [0, 4], sizes = [64, 4], strides = [1, 1]} : vector<64x8xf32> to vector<64x4xf32>
    %cst_12 = arith.constant dense<0.000000e+00> : vector<256x64xf32>
    %22 = tpu.matmul %9, %20, %cst_12 {dimension_numbers = #tpu.dot_dimension_numbers<[1], [1], [0], [0], [0, 0, 1, 0], [], []>} : vector<256x4xf32>, vector<64x4xf32>, vector<256x64xf32> -> vector<256x64xf32>
    %cst_13 = arith.constant dense<0xFF800000> : vector<256xf32>
    %23 = vector.multi_reduction <maximumf>, %22, %cst_13 [1] : vector<256x64xf32> to vector<256xf32>
    %24 = vector.shape_cast %23 : vector<256xf32> to vector<256x1xf32>
    %25 = vector.broadcast %24 : vector<256x1xf32> to vector<256x64xf32>
    %26 = arith.subf %22, %25 : vector<256x64xf32>
    %27 = math.exp %26 : vector<256x64xf32>
    %cst_14 = arith.constant dense<0.000000e+00> : vector<256xf32>
    %28 = vector.multi_reduction <add>, %27, %cst_14 [1] : vector<256x64xf32> to vector<256xf32>
    %29 = vector.shape_cast %28 : vector<256xf32> to vector<256x1xf32>
    %30 = vector.broadcast %29 : vector<256x1xf32> to vector<256x64xf32>
    %31 = arith.divf %27, %30 : vector<256x64xf32>
    %cst_15 = arith.constant dense<0.000000e+00> : vector<256x4xf32>
    %32 = tpu.matmul %31, %21, %cst_15 {dimension_numbers = #tpu.dot_dimension_numbers<[1], [0], [0], [1], [0, 0, 1, 1], [], []>} : vector<256x64xf32>, vector<64x4xf32>, vector<256x4xf32> -> vector<256x4xf32>
    %c0_16 = arith.constant 0 : index
    %c0_17 = arith.constant 0 : index
    %33 = vector.load %arg8[%c0_16, %c0_17] : memref<8x4xf32, #tpu.memory_space<vmem>>, vector<8x4xf32>
    %cst_18 = arith.constant dense<0.000000e+00> : vector<8x256xf32>
    %34 = tpu.matmul %33, %32, %cst_18 {dimension_numbers = #tpu.dot_dimension_numbers<[1], [1], [0], [0], [0, 0, 1, 0], [], []>} : vector<8x4xf32>, vector<256x4xf32>, vector<8x256xf32> -> vector<8x256xf32>
    %c0_19 = arith.constant 0 : index
    %c0_20 = arith.constant 0 : index
    %35 = vector.load %arg9[%c0_19, %c0_20] : memref<8x1xf32, #tpu.memory_space<vmem>>, vector<8x1xf32>
    %36 = vector.broadcast %35 : vector<8x1xf32> to vector<8x256xf32>
    %37 = arith.mulf %34, %36 : vector<8x256xf32>
    %c0_21 = arith.constant 0 : index
    %c0_22 = arith.constant 0 : index
    %38 = vector.load %arg10[%c0_21, %c0_22] : memref<8x1xf32, #tpu.memory_space<vmem>>, vector<8x1xf32>
    %39 = vector.broadcast %38 : vector<8x1xf32> to vector<8x256xf32>
    %40 = arith.addf %37, %39 : vector<8x256xf32>
    %41 = arith.addf %40, %3 : vector<8x256xf32>
    %c0_23 = arith.constant 0 : index
    %c0_24 = arith.constant 0 : index
    %c0_25 = arith.constant 0 : index
    %42 = vector.load %arg1[%c0_23, %c0_24, %c0_25] : memref<1x8x256xf32, #tpu.memory_space<vmem>>, vector<1x8x256xf32>
    %43 = vector.shape_cast %42 : vector<1x8x256xf32> to vector<8x256xf32>
    %c0_26 = arith.constant 0 : index
    %c0_27 = arith.constant 0 : index
    %c0_28 = arith.constant 0 : index
    %44 = vector.load %arg4[%c0_26, %c0_27, %c0_28] : memref<1x16x256xf32, #tpu.memory_space<vmem>>, vector<1x16x256xf32>
    %45 = vector.shape_cast %44 : vector<1x16x256xf32> to vector<16x256xf32>
    %46 = tpu.concatenate %43, %41, %45 in 0 : vector<8x256xf32>, vector<8x256xf32>, vector<16x256xf32> -> vector<32x256xf32>
    %cst_29 = arith.constant dense<0.000000e+00> : vector<32xf32>
    %47 = vector.multi_reduction <add>, %46, %cst_29 [1] : vector<32x256xf32> to vector<32xf32>
    %48 = vector.shape_cast %47 : vector<32xf32> to vector<32x1xf32>
    %cst_30 = arith.constant 3.906250e-03 : f32
    %49 = vector.broadcast %cst_30 : f32 to vector<32x1xf32>
    %50 = arith.mulf %48, %49 : vector<32x1xf32>
    %c0_31 = arith.constant 0 : index
    %c0_32 = arith.constant 0 : index
    %51 = vector.load %arg11[%c0_31, %c0_32] : memref<2x32xf32, #tpu.memory_space<vmem>>, vector<2x32xf32>
    %cst_33 = arith.constant dense<0.000000e+00> : vector<2x1xf32>
    %52 = tpu.matmul %51, %50, %cst_33 {dimension_numbers = #tpu.dot_dimension_numbers<[1], [0], [0], [1], [0, 0, 1, 1], [], []>} : vector<2x32xf32>, vector<32x1xf32>, vector<2x1xf32> -> vector<2x1xf32>
    %cst_34 = arith.constant 0.000000e+00 : f32
    %53 = vector.broadcast %cst_34 : f32 to vector<2x1xf32>
    %54 = arith.maximumf %52, %53 : vector<2x1xf32>
    %c0_35 = arith.constant 0 : index
    %c0_36 = arith.constant 0 : index
    %55 = vector.load %arg12[%c0_35, %c0_36] : memref<32x2xf32, #tpu.memory_space<vmem>>, vector<32x2xf32>
    %cst_37 = arith.constant dense<0.000000e+00> : vector<32x1xf32>
    %56 = tpu.matmul %55, %54, %cst_37 {dimension_numbers = #tpu.dot_dimension_numbers<[1], [0], [0], [1], [0, 0, 1, 1], [], []>} : vector<32x2xf32>, vector<2x1xf32>, vector<32x1xf32> -> vector<32x1xf32>
    %57 = arith.negf %56 : vector<32x1xf32>
    %58 = math.exp %57 : vector<32x1xf32>
    %cst_38 = arith.constant 1.000000e+00 : f32
    %59 = vector.broadcast %cst_38 : f32 to vector<32x1xf32>
    %60 = arith.addf %59, %58 : vector<32x1xf32>
    %61 = arith.divf %59, %60 : vector<32x1xf32>
    %62 = vector.broadcast %61 : vector<32x1xf32> to vector<32x256xf32>
    %63 = arith.mulf %46, %62 : vector<32x256xf32>
    %c0_39 = arith.constant 0 : index
    %c0_40 = arith.constant 0 : index
    %c0_41 = arith.constant 0 : index
    %64 = vector.load %arg13[%c0_39, %c0_40, %c0_41] : memref<1x32x256xf32, #tpu.memory_space<vmem>>, vector<1x32x256xf32>
    %65 = vector.shape_cast %64 : vector<1x32x256xf32> to vector<32x256xf32>
    %66 = vector.shape_cast %63 : vector<32x256xf32> to vector<1x32x256xf32>
    tpu.vector_store %arg13[%c0_39, %c0_40, %c0_41], %66 {strides = array<i32>} : memref<1x32x256xf32, #tpu.memory_space<vmem>>, vector<1x32x256xf32>,
    return
  }
  func.func @transform_0(%arg0: i32) -> (i32, i32, i32) {
    %c0_i32 = arith.constant 0 : i32
    %c0_i32_0 = arith.constant 0 : i32
    %c0_i32_1 = arith.constant 0 : i32
    return %arg0, %c0_i32, %c0_i32_0 : i32, i32, i32
  }
  func.func @transform_1(%arg0: i32) -> (i32, i32, i32) {
    %c0_i32 = arith.constant 0 : i32
    %c0_i32_0 = arith.constant 0 : i32
    %c0_i32_1 = arith.constant 0 : i32
    return %arg0, %c0_i32, %c0_i32_0 : i32, i32, i32
  }
  func.func @transform_2(%arg0: i32) -> (i32, i32, i32) {
    %c0_i32 = arith.constant 0 : i32
    %c0_i32_0 = arith.constant 0 : i32
    %c0_i32_1 = arith.constant 0 : i32
    return %arg0, %c0_i32, %c0_i32_0 : i32, i32, i32
  }
  func.func @transform_3(%arg0: i32) -> (i32, i32, i32) {
    %c0_i32 = arith.constant 0 : i32
    %c0_i32_0 = arith.constant 0 : i32
    %c0_i32_1 = arith.constant 0 : i32
    return %arg0, %c0_i32, %c0_i32_0 : i32, i32, i32
  }
  func.func @transform_4(%arg0: i32) -> (i32, i32) {
    %c0_i32 = arith.constant 0 : i32
    %c0_i32_0 = arith.constant 0 : i32
    %c0_i32_1 = arith.constant 0 : i32
    return %c0_i32, %c0_i32_0 : i32, i32
  }
  func.func @transform_5(%arg0: i32) -> (i32, i32) {
    %c0_i32 = arith.constant 0 : i32
    %c0_i32_0 = arith.constant 0 : i32
    %c0_i32_1 = arith.constant 0 : i32
    return %c0_i32, %c0_i32_0 : i32, i32
  }
  func.func @transform_6(%arg0: i32) -> (i32, i32) {
    %c0_i32 = arith.constant 0 : i32
    %c0_i32_0 = arith.constant 0 : i32
    %c0_i32_1 = arith.constant 0 : i32
    return %c0_i32, %c0_i32_0 : i32, i32
  }
  func.func @transform_7(%arg0: i32) -> (i32, i32) {
    %c0_i32 = arith.constant 0 : i32
    %c0_i32_0 = arith.constant 0 : i32
    %c0_i32_1 = arith.constant 0 : i32
    return %c0_i32, %c0_i32_0 : i32, i32
  }
  func.func @transform_8(%arg0: i32) -> (i32, i32) {
    %c0_i32 = arith.constant 0 : i32
    %c0_i32_0 = arith.constant 0 : i32
    %c0_i32_1 = arith.constant 0 : i32
    return %c0_i32, %c0_i32_0 : i32, i32
  }
  func.func @transform_9(%arg0: i32) -> (i32, i32) {
    %c0_i32 = arith.constant 0 : i32
    %c0_i32_0 = arith.constant 0 : i32
    %c0_i32_1 = arith.constant 0 : i32
    return %c0_i32, %c0_i32_0 : i32, i32
  }
  func.func @transform_10(%arg0: i32) -> (i32, i32) {
    %c0_i32 = arith.constant 0 : i32
    %c0_i32_0 = arith.constant 0 : i32
    %c0_i32_1 = arith.constant 0 : i32
    return %c0_i32, %c0_i32_0 : i32, i32
  }
  func.func @transform_11(%arg0: i32) -> (i32, i32) {
    %c0_i32 = arith.constant 0 : i32
    %c0_i32_0 = arith.constant 0 : i32
    %c0_i32_1 = arith.constant 0 : i32
    return %c0_i32, %c0_i32_0 : i32, i32
  }
  func.func @transform_12(%arg0: i32) -> (i32, i32, i32) {
    %c0_i32 = arith.constant 0 : i32
    %c0_i32_0 = arith.constant 0 : i32
    %c0_i32_1 = arith.constant 0 : i32
    return %arg0, %c0_i32, %c0_i32_0 : i32, i32, i32
  }
}

</mosaic_0001>

<llo_original>
// kernel: tpu_custom_call.1
$region0: #{tpu_custom_call.1}
  #allocation0 [shape = 'u32[]', space=smem, size = 0x4, offset = 0x4, fixed_abs, tag = 'smem constant byte address 0x4 - core index']
  #allocation1 [shape = 'u32[144,128]{1,0:T(1,128)}', space=vmem, size = 0x12000, scoped, tag = 'internal scratch']
  %s0 = inlined_call_operand.vmem [shape: f32[2,8,256], index: 0, kind: input, shape index: {}]
  %s1 = inlined_call_operand.hbm [shape: f32[2,8,256], index: 1, kind: input, shape index: {}]
  %s2 = inlined_call_operand.vmem [shape: f32[2,256,8], index: 2, kind: input, shape index: {}]
  %s3 = inlined_call_operand.vmem [shape: f32[2,16,256], index: 3, kind: input, shape index: {}]
  %s4 = inlined_call_operand.vmem [shape: f32[8,12], index: 4, kind: input, shape index: {}]
  %s5 = inlined_call_operand.vmem [shape: f32[1,12], index: 5, kind: input, shape index: {}]
  %s6 = inlined_call_operand.vmem [shape: f32[256,256], index: 6, kind: input, shape index: {}]
  %s7 = inlined_call_operand.vmem [shape: f32[8,4], index: 7, kind: input, shape index: {}]
  %s8 = inlined_call_operand.vmem [shape: f32[8,1], index: 8, kind: input, shape index: {}]
  %s9 = inlined_call_operand.vmem [shape: f32[8,1], index: 9, kind: input, shape index: {}]
  %s10 = inlined_call_operand.vmem [shape: f32[2,32], index: 10, kind: input, shape index: {}]
  %s11 = inlined_call_operand.vmem [shape: f32[32,2], index: 11, kind: input, shape index: {}]
  %s12 = inlined_call_operand.hbm [shape: f32[2,32,256], index: 12, kind: output, shape index: {}]
  %s13 = sld [smem:[#allocation0]]
  $region85: #{tpu_custom_call.1} parent=0
    _
  %s15 = ssub.s32 1, %s13
  %s16 = scalar_select 0, %s15, %s13
  $region1: #{tpu_custom_call.1} parent=0
    #allocation2 [shape = 'u8[16384]{0}', space=vmem, size = 0x4000, scoped, tag = 'input window, operand 1']
    #allocation3 [shape = 's32[2]{0}', space=sflag, size = 0x8, scoped, tag = 'scoped memory for tpu_custom_call.1']
    #allocation4 [shape = 's32[2]{0}', space=sflag, size = 0x8, scoped, tag = 'scoped memory for tpu_custom_call.1']
    #allocation5 [shape = 'u8[65536]{0}', space=vmem, size = 0x10000, scoped, tag = 'output window, operand 0']
    %17 = vsyncpa [#allocation3], 0
    %s18 = scalar_lea.sflag [#allocation3], 1
    %19 = vsyncpa %s18, 0
    %20 = vsyncpa [#allocation4], 0
    %s21 = scalar_lea.sflag [#allocation4], 1
    %22 = vsyncpa %s21, 0
    loop: start=0, step=1, limit=4
    $region2: #{tpu_custom_call.1} parent=1 // loop_pre_header
      _
    $region3: #{tpu_custom_call.1} parent=1 // loop_header
      %s24 = sphi 0, %s28
      %p25 = scmp.ge.s32.totalorder %s24, 4
      %s34 = sphi 0, %s36
      %s37 = sphi 0, %s34
      %s38 = sphi 0, %s37
      %s54 = sphi 0, %s38
      %s60 = sphi 0, %s62
      %s63 = sphi 0, %s60
      %s64 = sphi 0, %s63
      %s80 = sphi 0, %s64
      %s86 = sphi 0, %s88
      %s89 = sphi 0, %s86
      %s90 = sphi 0, %s89
      %s106 = sphi 0, %s90
      %s112 = sphi 0, %s114
      %s115 = sphi 0, %s112
      %s116 = sphi 0, %s115
      %s132 = sphi 0, %s116
      %s136 = sphi 0, %s136
      %s138 = sphi 0, %s136
      %s139 = sphi 0, %s138
      %s153 = sphi 0, %s139
      %s157 = sphi 0, %s157
      %s159 = sphi 0, %s157
      %s160 = sphi 0, %s159
      %s174 = sphi 0, %s160
      %s178 = sphi 0, %s178
      %s180 = sphi 0, %s178
      %s181 = sphi 0, %s180
      %s195 = sphi 0, %s181
      %s199 = sphi 0, %s199
      %s201 = sphi 0, %s199
      %s202 = sphi 0, %s201
      %s216 = sphi 0, %s202
      %s220 = sphi 0, %s220
      %s222 = sphi 0, %s220
      %s223 = sphi 0, %s222
      %s237 = sphi 0, %s223
      %s241 = sphi 0, %s241
      %s243 = sphi 0, %s241
      %s244 = sphi 0, %s243
      %s258 = sphi 0, %s244
      %s262 = sphi 0, %s262
      %s264 = sphi 0, %s262
      %s265 = sphi 0, %s264
      %s279 = sphi 0, %s265
      %s283 = sphi 0, %s283
      %s285 = sphi 0, %s283
      %s286 = sphi 0, %s285
      %s300 = sphi 0, %s286
      %s306 = sphi 0, %s308
      %s309 = sphi 0, %s306
      %s310 = sphi 0, %s309
      %s326 = sphi 0, %s310
    $region4: #{tpu_custom_call.1} parent=1 // loop_header_branch
      %27 = sbr.rel (%p25) target = $region8
    $region5: #{tpu_custom_call.1} parent=1 // loop_body
      %s29 = ssub.s32 %s24, 1
      %s30 = ssub.s32 %s24, 2
      %s31 = sadd.s32 %s24, 1
      %s32 = ssub.s32 %s24, %s31
      %p33 = scmp.eq.s32.totalorder %s32, 0
      %s35 = sadd.s32 %s34, 1
      %s36 = scalar_select %p33, %s34, %s35
      %p39 = pneg %p33
      %p40 = scmp.eq.s32.totalorder %s24, 1
      %p41 = por %p39, %p40
      %p42 = scmp.ne.s32.totalorder %s34, %s37
      %p43 = scmp.eq.s32.totalorder %s24, 0
      %p44 = por %p42, %p43
      %p45 = scmp.ne.s32.totalorder %s34, %s37
      %p46 = scmp.eq.s32.totalorder %s29, 1
      %p47 = por %p45, %p46
      %p48 = scmp.ne.s32.totalorder %s37, %s38
      %p49 = scmp.eq.s32.totalorder %s29, 0
      %p50 = por %p48, %p49
      %p51 = scmp.ne.s32.totalorder %s37, %s38
      %p52 = scmp.eq.s32.totalorder %s30, 1
      %p53 = por %p51, %p52
      %p55 = scmp.ne.s32.totalorder %s38, %s54
      %p56 = scmp.eq.s32.totalorder %s30, 0
      %p57 = por %p55, %p56
      %s58 = ssub.s32 %s24, %s31
      %p59 = scmp.eq.s32.totalorder %s58, 0
      %s61 = sadd.s32 %s60, 1
      %s62 = scalar_select %p59, %s60, %s61
      %p65 = pneg %p59
      %p66 = scmp.eq.s32.totalorder %s24, 1
      %p67 = por %p65, %p66
      %p68 = scmp.ne.s32.totalorder %s60, %s63
      %p69 = scmp.eq.s32.totalorder %s24, 0
      %p70 = por %p68, %p69
      %p71 = scmp.ne.s32.totalorder %s60, %s63
      %p72 = scmp.eq.s32.totalorder %s29, 1
      %p73 = por %p71, %p72
      %p74 = scmp.ne.s32.totalorder %s63, %s64
      %p75 = scmp.eq.s32.totalorder %s29, 0
      %p76 = por %p74, %p75
      %p77 = scmp.ne.s32.totalorder %s63, %s64
      %p78 = scmp.eq.s32.totalorder %s30, 1
      %p79 = por %p77, %p78
      %p81 = scmp.ne.s32.totalorder %s64, %s80
      %p82 = scmp.eq.s32.totalorder %s30, 0
      %p83 = por %p81, %p82
      %s84 = ssub.s32 %s24, %s31
      %p85 = scmp.eq.s32.totalorder %s84, 0
      %s87 = sadd.s32 %s86, 1
      %s88 = scalar_select %p85, %s86, %s87
      %p91 = pneg %p85
      %p92 = scmp.eq.s32.totalorder %s24, 1
      %p93 = por %p91, %p92
      %p94 = scmp.ne.s32.totalorder %s86, %s89
      %p95 = scmp.eq.s32.totalorder %s24, 0
      %p96 = por %p94, %p95
      %p97 = scmp.ne.s32.totalorder %s86, %s89
      %p98 = scmp.eq.s32.totalorder %s29, 1
      %p99 = por %p97, %p98
      %p100 = scmp.ne.s32.totalorder %s89, %s90
      %p101 = scmp.eq.s32.totalorder %s29, 0
      %p102 = por %p100, %p101
      %p103 = scmp.ne.s32.totalorder %s89, %s90
      %p104 = scmp.eq.s32.totalorder %s30, 1
      %p105 = por %p103, %p104
      %p107 = scmp.ne.s32.totalorder %s90, %s106
      %p108 = scmp.eq.s32.totalorder %s30, 0
      %p109 = por %p107, %p108
      %s110 = ssub.s32 %s24, %s31
      %p111 = scmp.eq.s32.totalorder %s110, 0
      %s113 = sadd.s32 %s112, 1
      %s114 = scalar_select %p111, %s112, %s113
      %p117 = pneg %p111
      %p118 = scmp.eq.s32.totalorder %s24, 1
      %p119 = por %p117, %p118
      %p120 = scmp.ne.s32.totalorder %s112, %s115
      %p121 = scmp.eq.s32.totalorder %s24, 0
      %p122 = por %p120, %p121
      %p123 = scmp.ne.s32.totalorder %s112, %s115
      %p124 = scmp.eq.s32.totalorder %s29, 1
      %p125 = por %p123, %p124
      %p126 = scmp.ne.s32.totalorder %s115, %s116
      %p127 = scmp.eq.s32.totalorder %s29, 0
      %p128 = por %p126, %p127
      %p129 = scmp.ne.s32.totalorder %s115, %s116
      %p130 = scmp.eq.s32.totalorder %s30, 1
      %p131 = por %p129, %p130
      %p133 = scmp.ne.s32.totalorder %s116, %s132
      %p134 = scmp.eq.s32.totalorder %s30, 0
      %p135 = por %p133, %p134
      %s137 = sadd.s32 %s136, 1
      %p140 = scmp.eq.s32.totalorder %s24, 1
      %p141 = scmp.ne.s32.totalorder %s136, %s138
      %p142 = scmp.eq.s32.totalorder %s24, 0
      %p143 = por %p141, %p142
      %p144 = scmp.ne.s32.totalorder %s136, %s138
      %p145 = scmp.eq.s32.totalorder %s29, 1
      %p146 = por %p144, %p145
      %p147 = scmp.ne.s32.totalorder %s138, %s139
      %p148 = scmp.eq.s32.totalorder %s29, 0
      %p149 = por %p147, %p148
      %p150 = scmp.ne.s32.totalorder %s138, %s139
      %p151 = scmp.eq.s32.totalorder %s30, 1
      %p152 = por %p150, %p151
      %p154 = scmp.ne.s32.totalorder %s139, %s153
      %p155 = scmp.eq.s32.totalorder %s30, 0
      %p156 = por %p154, %p155
      %s158 = sadd.s32 %s157, 1
      %p161 = scmp.eq.s32.totalorder %s24, 1
      %p162 = scmp.ne.s32.totalorder %s157, %s159
      %p163 = scmp.eq.s32.totalorder %s24, 0
      %p164 = por %p162, %p163
      %p165 = scmp.ne.s32.totalorder %s157, %s159
      %p166 = scmp.eq.s32.totalorder %s29, 1
      %p167 = por %p165, %p166
      %p168 = scmp.ne.s32.totalorder %s159, %s160
      %p169 = scmp.eq.s32.totalorder %s29, 0
      %p170 = por %p168, %p169
      %p171 = scmp.ne.s32.totalorder %s159, %s160
      %p172 = scmp.eq.s32.totalorder %s30, 1
      %p173 = por %p171, %p172
      %p175 = scmp.ne.s32.totalorder %s160, %s174
      %p176 = scmp.eq.s32.totalorder %s30, 0
      %p177 = por %p175, %p176
      %s179 = sadd.s32 %s178, 1
      %p182 = scmp.eq.s32.totalorder %s24, 1
      %p183 = scmp.ne.s32.totalorder %s178, %s180
      %p184 = scmp.eq.s32.totalorder %s24, 0
      %p185 = por %p183, %p184
      %p186 = scmp.ne.s32.totalorder %s178, %s180
      %p187 = scmp.eq.s32.totalorder %s29, 1
      %p188 = por %p186, %p187
      %p189 = scmp.ne.s32.totalorder %s180, %s181
      %p190 = scmp.eq.s32.totalorder %s29, 0
      %p191 = por %p189, %p190
      %p192 = scmp.ne.s32.totalorder %s180, %s181
      %p193 = scmp.eq.s32.totalorder %s30, 1
      %p194 = por %p192, %p193
      %p196 = scmp.ne.s32.totalorder %s181, %s195
      %p197 = scmp.eq.s32.totalorder %s30, 0
      %p198 = por %p196, %p197
      %s200 = sadd.s32 %s199, 1
      %p203 = scmp.eq.s32.totalorder %s24, 1
      %p204 = scmp.ne.s32.totalorder %s199, %s201
      %p205 = scmp.eq.s32.totalorder %s24, 0
      %p206 = por %p204, %p205
      %p207 = scmp.ne.s32.totalorder %s199, %s201
      %p208 = scmp.eq.s32.totalorder %s29, 1
      %p209 = por %p207, %p208
      %p210 = scmp.ne.s32.totalorder %s201, %s202
      %p211 = scmp.eq.s32.totalorder %s29, 0
      %p212 = por %p210, %p211
      %p213 = scmp.ne.s32.totalorder %s201, %s202
      %p214 = scmp.eq.s32.totalorder %s30, 1
      %p215 = por %p213, %p214
      %p217 = scmp.ne.s32.totalorder %s202, %s216
      %p218 = scmp.eq.s32.totalorder %s30, 0
      %p219 = por %p217, %p218
      %s221 = sadd.s32 %s220, 1
      %p224 = scmp.eq.s32.totalorder %s24, 1
      %p225 = scmp.ne.s32.totalorder %s220, %s222
      %p226 = scmp.eq.s32.totalorder %s24, 0
      %p227 = por %p225, %p226
      %p228 = scmp.ne.s32.totalorder %s220, %s222
      %p229 = scmp.eq.s32.totalorder %s29, 1
      %p230 = por %p228, %p229
      %p231 = scmp.ne.s32.totalorder %s222, %s223
      %p232 = scmp.eq.s32.totalorder %s29, 0
      %p233 = por %p231, %p232
      %p234 = scmp.ne.s32.totalorder %s222, %s223
      %p235 = scmp.eq.s32.totalorder %s30, 1
      %p236 = por %p234, %p235
      %p238 = scmp.ne.s32.totalorder %s223, %s237
      %p239 = scmp.eq.s32.totalorder %s30, 0
      %p240 = por %p238, %p239
      %s242 = sadd.s32 %s241, 1
      %p245 = scmp.eq.s32.totalorder %s24, 1
      %p246 = scmp.ne.s32.totalorder %s241, %s243
      %p247 = scmp.eq.s32.totalorder %s24, 0
      %p248 = por %p246, %p247
      %p249 = scmp.ne.s32.totalorder %s241, %s243
      %p250 = scmp.eq.s32.totalorder %s29, 1
      %p251 = por %p249, %p250
      %p252 = scmp.ne.s32.totalorder %s243, %s244
      %p253 = scmp.eq.s32.totalorder %s29, 0
      %p254 = por %p252, %p253
      %p255 = scmp.ne.s32.totalorder %s243, %s244
      %p256 = scmp.eq.s32.totalorder %s30, 1
      %p257 = por %p255, %p256
      %p259 = scmp.ne.s32.totalorder %s244, %s258
      %p260 = scmp.eq.s32.totalorder %s30, 0
      %p261 = por %p259, %p260
      %s263 = sadd.s32 %s262, 1
      %p266 = scmp.eq.s32.totalorder %s24, 1
      %p267 = scmp.ne.s32.totalorder %s262, %s264
      %p268 = scmp.eq.s32.totalorder %s24, 0
      %p269 = por %p267, %p268
      %p270 = scmp.ne.s32.totalorder %s262, %s264
      %p271 = scmp.eq.s32.totalorder %s29, 1
      %p272 = por %p270, %p271
      %p273 = scmp.ne.s32.totalorder %s264, %s265
      %p274 = scmp.eq.s32.totalorder %s29, 0
      %p275 = por %p273, %p274
      %p276 = scmp.ne.s32.totalorder %s264, %s265
      %p277 = scmp.eq.s32.totalorder %s30, 1
      %p278 = por %p276, %p277
      %p280 = scmp.ne.s32.totalorder %s265, %s279
      %p281 = scmp.eq.s32.totalorder %s30, 0
      %p282 = por %p280, %p281
      %s284 = sadd.s32 %s283, 1
      %p287 = scmp.eq.s32.totalorder %s24, 1
      %p288 = scmp.ne.s32.totalorder %s283, %s285
      %p289 = scmp.eq.s32.totalorder %s24, 0
      %p290 = por %p288, %p289
      %p291 = scmp.ne.s32.totalorder %s283, %s285
      %p292 = scmp.eq.s32.totalorder %s29, 1
      %p293 = por %p291, %p292
      %p294 = scmp.ne.s32.totalorder %s285, %s286
      %p295 = scmp.eq.s32.totalorder %s29, 0
      %p296 = por %p294, %p295
      %p297 = scmp.ne.s32.totalorder %s285, %s286
      %p298 = scmp.eq.s32.totalorder %s30, 1
      %p299 = por %p297, %p298
      %p301 = scmp.ne.s32.totalorder %s286, %s300
      %p302 = scmp.eq.s32.totalorder %s30, 0
      %p303 = por %p301, %p302
      %s304 = ssub.s32 %s24, %s31
      %p305 = scmp.eq.s32.totalorder %s304, 0
      %s307 = sadd.s32 %s306, 1
      %s308 = scalar_select %p305, %s306, %s307
      %p311 = pneg %p305
      %p312 = scmp.eq.s32.totalorder %s24, 1
      %p313 = por %p311, %p312
      %p314 = scmp.ne.s32.totalorder %s306, %s309
      %p315 = scmp.eq.s32.totalorder %s24, 0
      %p316 = por %p314, %p315
      %p317 = scmp.ne.s32.totalorder %s306, %s309
      %p318 = scmp.eq.s32.totalorder %s29, 1
      %p319 = por %p317, %p318
      %p320 = scmp.ne.s32.totalorder %s309, %s310
      %p321 = scmp.eq.s32.totalorder %s29, 0
      %p322 = por %p320, %p321
      %p323 = scmp.ne.s32.totalorder %s309, %s310
      %p324 = scmp.eq.s32.totalorder %s30, 1
      %p325 = por %p323, %p324
      %p327 = scmp.ne.s32.totalorder %s310, %s326
      %p328 = scmp.eq.s32.totalorder %s30, 0
      %p329 = por %p327, %p328
      %p330 = scmp.le.s32.totalorder 1, %s24
      %p331 = scmp.lt.s32.totalorder %s24, 3
      %p332 = pnand %p330, %p331
      %p333 = pneg %p332
      // Predicated region
      $region9: #{tpu_custom_call.1} parent=5 // pred_check
        _
      $region10: #{tpu_custom_call.1} parent=5 // pred_check_branch
        %335 = sbr.rel (%p332) target = $region12
      $region11: #{tpu_custom_call.1} parent=5 // pred_region
        %s336 = ssub.s32 %s24, 1
        // Predicated region
        $region13: #{tpu_custom_call.1} parent=11 // pred_check
          %p337 = pneg %p149
        $region14: #{tpu_custom_call.1} parent=11 // pred_check_branch
          %339 = sbr.rel (%p337) target = $region16
        $region15: #{tpu_custom_call.1} parent=11 // pred_region
          _
        $region16: #{tpu_custom_call.1} parent=11 // pred_fallthru
          _
        // Predicated region
        $region17: #{tpu_custom_call.1} parent=11 // pred_check
          %p340 = pneg %p170
        $region18: #{tpu_custom_call.1} parent=11 // pred_check_branch
          %342 = sbr.rel (%p340) target = $region20
        $region19: #{tpu_custom_call.1} parent=11 // pred_region
          _
        $region20: #{tpu_custom_call.1} parent=11 // pred_fallthru
          _
        // Predicated region
        $region21: #{tpu_custom_call.1} parent=11 // pred_check
          %p343 = pneg %p191
        $region22: #{tpu_custom_call.1} parent=11 // pred_check_branch
          %345 = sbr.rel (%p343) target = $region24
        $region23: #{tpu_custom_call.1} parent=11 // pred_region
          _
        $region24: #{tpu_custom_call.1} parent=11 // pred_fallthru
          _
        // Predicated region
        $region25: #{tpu_custom_call.1} parent=11 // pred_check
          %p346 = pneg %p212
        $region26: #{tpu_custom_call.1} parent=11 // pred_check_branch
          %348 = sbr.rel (%p346) target = $region28
        $region27: #{tpu_custom_call.1} parent=11 // pred_region
          _
        $region28: #{tpu_custom_call.1} parent=11 // pred_fallthru
          _
        // Predicated region
        $region29: #{tpu_custom_call.1} parent=11 // pred_check
          %p349 = pneg %p233
        $region30: #{tpu_custom_call.1} parent=11 // pred_check_branch
          %351 = sbr.rel (%p349) target = $region32
        $region31: #{tpu_custom_call.1} parent=11 // pred_region
          _
        $region32: #{tpu_custom_call.1} parent=11 // pred_fallthru
          _
        // Predicated region
        $region33: #{tpu_custom_call.1} parent=11 // pred_check
          %p352 = pneg %p254
        $region34: #{tpu_custom_call.1} parent=11 // pred_check_branch
          %354 = sbr.rel (%p352) target = $region36
        $region35: #{tpu_custom_call.1} parent=11 // pred_region
          _
        $region36: #{tpu_custom_call.1} parent=11 // pred_fallthru
          _
        // Predicated region
        $region37: #{tpu_custom_call.1} parent=11 // pred_check
          %p355 = pneg %p275
        $region38: #{tpu_custom_call.1} parent=11 // pred_check_branch
          %357 = sbr.rel (%p355) target = $region40
        $region39: #{tpu_custom_call.1} parent=11 // pred_region
          _
        $region40: #{tpu_custom_call.1} parent=11 // pred_fallthru
          _
        // Predicated region
        $region41: #{tpu_custom_call.1} parent=11 // pred_check
          %p358 = pneg %p296
        $region42: #{tpu_custom_call.1} parent=11 // pred_check_branch
          %360 = sbr.rel (%p358) target = $region44
        $region43: #{tpu_custom_call.1} parent=11 // pred_region
          _
        $region44: #{tpu_custom_call.1} parent=11 // pred_fallthru
          _
      $region12: #{tpu_custom_call.1} parent=5 // pred_fallthru
        _
      %p361 = scmp.lt.s32.totalorder %s24, 2
      // Predicated region
      $region45: #{tpu_custom_call.1} parent=5 // pred_check
        %p362 = pneg %p361
      $region46: #{tpu_custom_call.1} parent=5 // pred_check_branch
        %364 = sbr.rel (%p362) target = $region48
      $region47: #{tpu_custom_call.1} parent=5 // pred_region
        // Predicated region
        $region49: #{tpu_custom_call.1} parent=47 // pred_check
          %p365 = pneg %p44
        $region50: #{tpu_custom_call.1} parent=47 // pred_check_branch
          %367 = sbr.rel (%p365) target = $region52
        $region51: #{tpu_custom_call.1} parent=47 // pred_region
          %p368 = scmp.lt.s32.totalorder %s24, 1
          %s369 = scalar_select %p368, %s24, 1
          %s370 = smul.addr %s369, 2
          %s371 = smul.addr %s370, 8
          %s372 = scalar_lea.vmem %s0, %s371
        $region52: #{tpu_custom_call.1} parent=47 // pred_fallthru
          _
        // Predicated region
        $region53: #{tpu_custom_call.1} parent=47 // pred_check
          %p373 = pneg %p70
        $region54: #{tpu_custom_call.1} parent=47 // pred_check_branch
          %375 = sbr.rel (%p373) target = $region56
        $region55: #{tpu_custom_call.1} parent=47 // pred_region
          %s376 = sand.u32 %s60, 1
          %s377 = scalar_lea.sflag [#allocation3], %s376
          %s378 = sand.u32 %s60, 1
          %s379 = smul.addr %s378, 16
          %s380 = scalar_lea.vmem [#allocation2], %s379
          %s382 = ssub.s32 256, 256
          %383 = vsyncadd %s377, %s382
          %s384 = smul.addr %s24, 2
          %s385 = smul.addr %s384, 128
          %s386 = scalar_lea.hbm %s1, %s385
          %s388 = sshll.u32 %s380, 4
          %s389 = int_to_ptr.vmem [resolvable:$true] %s388
          %391 = dma.hbm_to_vmem [thread:$0]  %s386, 256, %s389, %s377
        $region56: #{tpu_custom_call.1} parent=47 // pred_fallthru
          _
        // Predicated region
        $region57: #{tpu_custom_call.1} parent=47 // pred_check
          %p392 = pneg %p96
        $region58: #{tpu_custom_call.1} parent=47 // pred_check_branch
          %394 = sbr.rel (%p392) target = $region60
        $region59: #{tpu_custom_call.1} parent=47 // pred_region
          %p395 = scmp.lt.s32.totalorder %s24, 1
          %s396 = scalar_select %p395, %s24, 1
          %s397 = smul.addr %s396, 32
          %s398 = smul.addr %s397, 8
          %s399 = scalar_lea.vmem %s2, %s398
        $region60: #{tpu_custom_call.1} parent=47 // pred_fallthru
          _
        // Predicated region
        $region61: #{tpu_custom_call.1} parent=47 // pred_check
          %p400 = pneg %p122
        $region62: #{tpu_custom_call.1} parent=47 // pred_check_branch
          %402 = sbr.rel (%p400) target = $region64
        $region63: #{tpu_custom_call.1} parent=47 // pred_region
          %p403 = scmp.lt.s32.totalorder %s24, 1
          %s404 = scalar_select %p403, %s24, 1
          %s405 = smul.addr %s404, 4
          %s406 = smul.addr %s405, 8
          %s407 = scalar_lea.vmem %s3, %s406
        $region64: #{tpu_custom_call.1} parent=47 // pred_fallthru
          _
      $region48: #{tpu_custom_call.1} parent=5 // pred_fallthru
        _
      %p408 = scmp.le.s32.totalorder 1, %s24
      %p409 = scmp.lt.s32.totalorder %s24, 3
      %p410 = pnand %p408, %p409
      %p411 = pneg %p410
      // Predicated region
      $region65: #{tpu_custom_call.1} parent=5 // pred_check
        _
      $region66: #{tpu_custom_call.1} parent=5 // pred_check_branch
        %413 = sbr.rel (%p410) target = $region68
      $region67: #{tpu_custom_call.1} parent=5 // pred_region
        %s414 = ssub.s32 %s24, 1
        %s415 = sand.u32 %s63, 1
        %s416 = scalar_lea.sflag [#allocation3], %s415
        %s417 = sand.u32 %s63, 1
        %s418 = smul.addr %s417, 16
        %s419 = scalar_lea.vmem [#allocation2], %s418
        // Predicated region
        $region69: #{tpu_custom_call.1} parent=67 // pred_check
          %p420 = pneg %p76
        $region70: #{tpu_custom_call.1} parent=67 // pred_check_branch
          %422 = sbr.rel (%p420) target = $region72
        $region71: #{tpu_custom_call.1} parent=67 // pred_region
          %423 = dma.done %s416, 256
        $region72: #{tpu_custom_call.1} parent=67 // pred_fallthru
          _
        %p424 = scmp.lt.s32.totalorder %s29, 1
        %s425 = scalar_select %p424, %s29, 1
        %s426 = smul.addr %s425, 2
        %s427 = smul.addr %s426, 8
        %s428 = scalar_lea.vmem %s0, %s427
        %p429 = pneg %p50
        %p430 = pneg %p47
        %s431 = sand.u32 %s63, 1
        %s432 = scalar_lea.sflag [#allocation3], %s431
        %s433 = sand.u32 %s63, 1
        %s434 = smul.addr %s433, 16
        %s435 = scalar_lea.vmem [#allocation2], %s434
        %p436 = pneg %p76
        %p437 = pneg %p73
        %p438 = scmp.lt.s32.totalorder %s29, 1
        %s439 = scalar_select %p438, %s29, 1
        %s440 = smul.addr %s439, 32
        %s441 = smul.addr %s440, 8
        %s442 = scalar_lea.vmem %s2, %s441
        %p443 = pneg %p102
        %p444 = pneg %p99
        %p445 = scmp.lt.s32.totalorder %s29, 1
        %s446 = scalar_select %p445, %s29, 1
        %s447 = smul.addr %s446, 4
        %s448 = smul.addr %s447, 8
        %s449 = scalar_lea.vmem %s3, %s448
        %p450 = pneg %p128
        %p451 = pneg %p125
        %p452 = pneg %p149
        %p453 = pneg %p146
        %p454 = pneg %p170
        %p455 = pneg %p167
        %p456 = pneg %p191
        %p457 = pneg %p188
        %p458 = pneg %p212
        %p459 = pneg %p209
        %p460 = pneg %p233
        %p461 = pneg %p230
        %p462 = pneg %p254
        %p463 = pneg %p251
        %p464 = pneg %p275
        %p465 = pneg %p272
        %p466 = pneg %p296
        %p467 = pneg %p293
        %p468 = pneg %p322
        %p469 = pneg %p319
        %s470 = sand.u32 %s309, 1
        %s471 = scalar_lea.sflag [#allocation4], %s470
        %s472 = sand.u32 %s309, 1
        %s473 = smul.addr %s472, 64
        %s474 = scalar_lea.vmem [#allocation5], %s473
        %p475 = scmp.lt.s32.totalorder %s29, 1
        %s476 = scalar_select %p475, %s29, 1
        %s477 = smul.addr %s476, 2
        %s478 = smul.addr %s477, 8
        %s479 = scalar_lea.vmem %s0, %s478
        %p480 = scmp.lt.s32.totalorder %s29, 1
        %s481 = scalar_select %p480, %s29, 1
        %s482 = smul.addr %s481, 32
        %s483 = smul.addr %s482, 8
        %s484 = scalar_lea.vmem %s2, %s483
        %p485 = scmp.lt.s32.totalorder %s29, 1
        %s486 = scalar_select %p485, %s29, 1
        %s487 = smul.addr %s486, 4
        %s488 = smul.addr %s487, 8
        %s489 = scalar_lea.vmem %s3, %s488
        %v490 = vld [vmem:[%s484] sm:$0xff]
        %v491 = vld [vmem:[%s484 + $0x8] sm:$0xff]
        %v492 = vld [vmem:[%s484 + $0x10] sm:$0xff]
        %v493 = vld [vmem:[%s484 + $0x18] sm:$0xff]
        %v494 = vld [vmem:[%s484 + $0x20] sm:$0xff]
        %v495 = vld [vmem:[%s484 + $0x28] sm:$0xff]
        %v496 = vld [vmem:[%s484 + $0x30] sm:$0xff]
        %v497 = vld [vmem:[%s484 + $0x38] sm:$0xff]
        %v498 = vld [vmem:[%s484 + $0x40] sm:$0xff]
        %v499 = vld [vmem:[%s484 + $0x48] sm:$0xff]
        %v500 = vld [vmem:[%s484 + $0x50] sm:$0xff]
        %v501 = vld [vmem:[%s484 + $0x58] sm:$0xff]
        %v502 = vld [vmem:[%s484 + $0x60] sm:$0xff]
        %v503 = vld [vmem:[%s484 + $0x68] sm:$0xff]
        %v504 = vld [vmem:[%s484 + $0x70] sm:$0xff]
        %v505 = vld [vmem:[%s484 + $0x78] sm:$0xff]
        %v506 = vld [vmem:[%s484 + $0x80] sm:$0xff]
        %v507 = vld [vmem:[%s484 + $0x88] sm:$0xff]
        %v508 = vld [vmem:[%s484 + $0x90] sm:$0xff]
        %v509 = vld [vmem:[%s484 + $0x98] sm:$0xff]
        %v510 = vld [vmem:[%s484 + $0xa0] sm:$0xff]
        %v511 = vld [vmem:[%s484 + $0xa8] sm:$0xff]
        %v512 = vld [vmem:[%s484 + $0xb0] sm:$0xff]
        %v513 = vld [vmem:[%s484 + $0xb8] sm:$0xff]
        %v514 = vld [vmem:[%s484 + $0xc0] sm:$0xff]
        %v515 = vld [vmem:[%s484 + $0xc8] sm:$0xff]
        %v516 = vld [vmem:[%s484 + $0xd0] sm:$0xff]
        %v517 = vld [vmem:[%s484 + $0xd8] sm:$0xff]
        %v518 = vld [vmem:[%s484 + $0xe0] sm:$0xff]
        %v519 = vld [vmem:[%s484 + $0xe8] sm:$0xff]
        %v520 = vld [vmem:[%s484 + $0xf0] sm:$0xff]
        %v521 = vld [vmem:[%s484 + $0xf8] sm:$0xff]
        %v522 = vld [vmem:[%s419] sm:$0xff]
        %v523 = vld [vmem:[%s419 + $0x8] sm:$0xff]
        %v524 = vld [vmem:[%s4] sm:$0xff]
        %v525 = vld [vmem:[%s5] sm:$0x1]
        %v527 = vlaneseq
        %v528 = vshrl.u32 %v527, 7
        %v529 = vsub.s32 0, %v528
        %v530 = vrot.slane %v525, %v529
        %vm532 = vcmask 64512
        %v534 = vsel %vm532, %v490, 0
        %v537 = vsel %vm532, %v491, 0
        %v540 = vsel %vm532, %v492, 0
        %v543 = vsel %vm532, %v493, 0
        %v546 = vsel %vm532, %v494, 0
        %v549 = vsel %vm532, %v495, 0
        %v552 = vsel %vm532, %v496, 0
        %v555 = vsel %vm532, %v497, 0
        %v558 = vsel %vm532, %v498, 0
        %v561 = vsel %vm532, %v499, 0
        %v564 = vsel %vm532, %v500, 0
        %v567 = vsel %vm532, %v501, 0
        %v570 = vsel %vm532, %v502, 0
        %v573 = vsel %vm532, %v503, 0
        %v576 = vsel %vm532, %v504, 0
        %v579 = vsel %vm532, %v505, 0
        %v582 = vsel %vm532, %v506, 0
        %v585 = vsel %vm532, %v507, 0
        %v588 = vsel %vm532, %v508, 0
        %v591 = vsel %vm532, %v509, 0
        %v594 = vsel %vm532, %v510, 0
        %v597 = vsel %vm532, %v511, 0
        %v600 = vsel %vm532, %v512, 0
        %v603 = vsel %vm532, %v513, 0
        %v606 = vsel %vm532, %v514, 0
        %v609 = vsel %vm532, %v515, 0
        %v612 = vsel %vm532, %v516, 0
        %v615 = vsel %vm532, %v517, 0
        %v618 = vsel %vm532, %v518, 0
        %v621 = vsel %vm532, %v519, 0
        %v624 = vsel %vm532, %v520, 0
        %v627 = vsel %vm532, %v521, 0
        %629 = vmatprep.subr.mxu0 0.0
        %630 = vmatpush1.msra.mxu0 %v524
        %631 = vmatprep.subr.mxu0 0.0
        %632 = vmatpush1.msra.mxu0 0.0
        %633 = vmatprep.subr.mxu0 0.0
        %634 = vmatpush1.msra.mxu0 0.0
        %635 = vmatprep.subr.mxu0 0.0
        %636 = vmatpush1.msra.mxu0 0.0
        %637 = vmatprep.subr.mxu0 0.0
        %638 = vmatpush1.msra.mxu0 0.0
        %639 = vmatprep.subr.mxu0 0.0
        %640 = vmatpush1.msra.mxu0 0.0
        %641 = vmatprep.subr.mxu0 0.0
        %642 = vmatpush1.msra.mxu0 0.0
        %643 = vmatprep.subr.mxu0 0.0
        %644 = vmatpush1.msra.mxu0 0.0
        %645 = vmatprep.subr.mxu0 0.0
        %646 = vmatpush1.msra.mxu0 0.0
        %647 = vmatprep.subr.mxu0 0.0
        %648 = vmatpush1.msra.mxu0 0.0
        %649 = vmatprep.subr.mxu0 0.0
        %650 = vmatpush1.msra.mxu0 0.0
        %651 = vmatprep.subr.mxu0 0.0
        %652 = vmatpush1.msra.mxu0 0.0
        %653 = vmatprep.subr.mxu0 0.0
        %654 = vmatpush1.msra.mxu0 0.0
        %655 = vmatprep.subr.mxu0 0.0
        %656 = vmatpush1.msra.mxu0 0.0
        %657 = vmatprep.subr.mxu0 0.0
        %658 = vmatpush1.msra.mxu0 0.0
        %659 = vmatprep.subr.mxu0 0.0
        %660 = vmatpush1.msra.mxu0 0.0
        %661 = vmatprep.subr.mxu0 0.0
        %662 = vmatpush1.msra.mxu0 0.0
        %663 = vmatprep.subr.mxu0 0.0
        %664 = vmatpush1.msra.mxu0 0.0
        %665 = vmatprep.subr.mxu0 0.0
        %666 = vmatpush1.msra.mxu0 0.0
        %667 = vmatprep.subr.mxu0 0.0
        %668 = vmatpush1.msra.mxu0 0.0
        %669 = vmatprep.subr.mxu0 0.0
        %670 = vmatpush1.msra.mxu0 0.0
        %671 = vmatprep.subr.mxu0 0.0
        %672 = vmatpush1.msra.mxu0 0.0
        %673 = vmatprep.subr.mxu0 0.0
        %674 = vmatpush1.msra.mxu0 0.0
        %675 = vmatprep.subr.mxu0 0.0
        %676 = vmatpush1.msra.mxu0 0.0
        %677 = vmatprep.subr.mxu0 0.0
        %678 = vmatpush1.msra.mxu0 0.0
        %679 = vmatprep.subr.mxu0 0.0
        %680 = vmatpush1.msra.mxu0 0.0
        %681 = vmatprep.subr.mxu0 0.0
        %682 = vmatpush1.msra.mxu0 0.0
        %683 = vmatprep.subr.mxu0 0.0
        %684 = vmatpush1.msra.mxu0 0.0
        %685 = vmatprep.subr.mxu0 0.0
        %686 = vmatpush1.msra.mxu0 0.0
        %687 = vmatprep.subr.mxu0 0.0
        %688 = vmatpush1.msra.mxu0 0.0
        %689 = vmatprep.subr.mxu0 0.0
        %690 = vmatpush1.msra.mxu0 0.0
        %691 = vmatprep.subr.mxu0 0.0
        %692 = vmatpush1.msra.mxu0 0.0
        %693 = vmatprep.mubr.f32.mxu0 0.0
        %694 = vmatmul.mubr.f32.gmra.mrb[0].mxu0 %v534
        %v695 = vpop.f32.mrb[0].mxu0
        %v696 = vadd.f32 %v530, %v695
        %v697 = vpop.f32.mrb[0].mxu0
        %698 = vmatprep.mubr.f32.mxu0 0.0
        %699 = vmatmul.mubr.f32.gmra.mrb[0].mxu0 %v537
        %v700 = vpop.f32.mrb[0].mxu0
        %v701 = vadd.f32 %v530, %v700
        %v702 = vpop.f32.mrb[0].mxu0
        %703 = vmatprep.mubr.f32.mxu0 0.0
        %704 = vmatmul.mubr.f32.gmra.mrb[0].mxu0 %v540
        %v705 = vpop.f32.mrb[0].mxu0
        %v706 = vadd.f32 %v530, %v705
        %v707 = vpop.f32.mrb[0].mxu0
        %708 = vmatprep.mubr.f32.mxu0 0.0
        %709 = vmatmul.mubr.f32.gmra.mrb[0].mxu0 %v543
        %v710 = vpop.f32.mrb[0].mxu0
        %v711 = vadd.f32 %v530, %v710
        %v712 = vpop.f32.mrb[0].mxu0
        %713 = vmatprep.mubr.f32.mxu0 0.0
        %714 = vmatmul.mubr.f32.gmra.mrb[0].mxu0 %v546
        %v715 = vpop.f32.mrb[0].mxu0
        %v716 = vadd.f32 %v530, %v715
        %v717 = vpop.f32.mrb[0].mxu0
        %718 = vmatprep.mubr.f32.mxu0 0.0
        %719 = vmatmul.mubr.f32.gmra.mrb[0].mxu0 %v549
        %v720 = vpop.f32.mrb[0].mxu0
        %v721 = vadd.f32 %v530, %v720
        %v722 = vpop.f32.mrb[0].mxu0
        %723 = vmatprep.mubr.f32.mxu0 0.0
        %724 = vmatmul.mubr.f32.gmra.mrb[0].mxu0 %v552
        %v725 = vpop.f32.mrb[0].mxu0
        %v726 = vadd.f32 %v530, %v725
        %v727 = vpop.f32.mrb[0].mxu0
        %728 = vmatprep.mubr.f32.mxu0 0.0
        %729 = vmatmul.mubr.f32.gmra.mrb[0].mxu0 %v555
        %v730 = vpop.f32.mrb[0].mxu0
        %v731 = vadd.f32 %v530, %v730
        %v732 = vpop.f32.mrb[0].mxu0
        %733 = vmatprep.mubr.f32.mxu0 0.0
        %734 = vmatmul.mubr.f32.gmra.mrb[0].mxu0 %v558
        %v735 = vpop.f32.mrb[0].mxu0
        %v736 = vadd.f32 %v530, %v735
        %v737 = vpop.f32.mrb[0].mxu0
        %738 = vmatprep.mubr.f32.mxu0 0.0
        %739 = vmatmul.mubr.f32.gmra.mrb[0].mxu0 %v561
        %v740 = vpop.f32.mrb[0].mxu0
        %v741 = vadd.f32 %v530, %v740
        %v742 = vpop.f32.mrb[0].mxu0
        %743 = vmatprep.mubr.f32.mxu0 0.0
        %744 = vmatmul.mubr.f32.gmra.mrb[0].mxu0 %v564
        %v745 = vpop.f32.mrb[0].mxu0
        %v746 = vadd.f32 %v530, %v745
        %v747 = vpop.f32.mrb[0].mxu0
        %748 = vmatprep.mubr.f32.mxu0 0.0
        %749 = vmatmul.mubr.f32.gmra.mrb[0].mxu0 %v567
        %v750 = vpop.f32.mrb[0].mxu0
        %v751 = vadd.f32 %v530, %v750
        %v752 = vpop.f32.mrb[0].mxu0
        %753 = vmatprep.mubr.f32.mxu0 0.0
        %754 = vmatmul.mubr.f32.gmra.mrb[0].mxu0 %v570
        %v755 = vpop.f32.mrb[0].mxu0
        %v756 = vadd.f32 %v530, %v755
        %v757 = vpop.f32.mrb[0].mxu0
        %758 = vmatprep.mubr.f32.mxu0 0.0
        %759 = vmatmul.mubr.f32.gmra.mrb[0].mxu0 %v573
        %v760 = vpop.f32.mrb[0].mxu0
        %v761 = vadd.f32 %v530, %v760
        %v762 = vpop.f32.mrb[0].mxu0
        %763 = vmatprep.mubr.f32.mxu0 0.0
        %764 = vmatmul.mubr.f32.gmra.mrb[0].mxu0 %v576
        %v765 = vpop.f32.mrb[0].mxu0
        %v766 = vadd.f32 %v530, %v765
        %v767 = vpop.f32.mrb[0].mxu0
        %768 = vmatprep.mubr.f32.mxu0 0.0
        %769 = vmatmul.mubr.f32.gmra.mrb[0].mxu0 %v579
        %v770 = vpop.f32.mrb[0].mxu0
        %v771 = vadd.f32 %v530, %v770
        %v772 = vpop.f32.mrb[0].mxu0
        %773 = vmatprep.mubr.f32.mxu0 0.0
        %774 = vmatmul.mubr.f32.gmra.mrb[0].mxu0 %v582
        %v775 = vpop.f32.mrb[0].mxu0
        %v776 = vadd.f32 %v530, %v775
        %v777 = vpop.f32.mrb[0].mxu0
        %778 = vmatprep.mubr.f32.mxu0 0.0
        %779 = vmatmul.mubr.f32.gmra.mrb[0].mxu0 %v585
        %v780 = vpop.f32.mrb[0].mxu0
        %v781 = vadd.f32 %v530, %v780
        %v782 = vpop.f32.mrb[0].mxu0
        %783 = vmatprep.mubr.f32.mxu0 0.0
        %784 = vmatmul.mubr.f32.gmra.mrb[0].mxu0 %v588
        %v785 = vpop.f32.mrb[0].mxu0
        %v786 = vadd.f32 %v530, %v785
        %v787 = vpop.f32.mrb[0].mxu0
        %788 = vmatprep.mubr.f32.mxu0 0.0
        %789 = vmatmul.mubr.f32.gmra.mrb[0].mxu0 %v591
        %v790 = vpop.f32.mrb[0].mxu0
        %v791 = vadd.f32 %v530, %v790
        %v792 = vpop.f32.mrb[0].mxu0
        %793 = vmatprep.mubr.f32.mxu0 0.0
        %794 = vmatmul.mubr.f32.gmra.mrb[0].mxu0 %v594
        %v795 = vpop.f32.mrb[0].mxu0
        %v796 = vadd.f32 %v530, %v795
        %v797 = vpop.f32.mrb[0].mxu0
        %798 = vmatprep.mubr.f32.mxu0 0.0
        %799 = vmatmul.mubr.f32.gmra.mrb[0].mxu0 %v597
        %v800 = vpop.f32.mrb[0].mxu0
        %v801 = vadd.f32 %v530, %v800
        %v802 = vpop.f32.mrb[0].mxu0
        %803 = vmatprep.mubr.f32.mxu0 0.0
        %804 = vmatmul.mubr.f32.gmra.mrb[0].mxu0 %v600
        %v805 = vpop.f32.mrb[0].mxu0
        %v806 = vadd.f32 %v530, %v805
        %v807 = vpop.f32.mrb[0].mxu0
        %808 = vmatprep.mubr.f32.mxu0 0.0
        %809 = vmatmul.mubr.f32.gmra.mrb[0].mxu0 %v603
        %v810 = vpop.f32.mrb[0].mxu0
        %v811 = vadd.f32 %v530, %v810
        %v812 = vpop.f32.mrb[0].mxu0
        %813 = vmatprep.mubr.f32.mxu0 0.0
        %814 = vmatmul.mubr.f32.gmra.mrb[0].mxu0 %v606
        %v815 = vpop.f32.mrb[0].mxu0
        %v816 = vadd.f32 %v530, %v815
        %v817 = vpop.f32.mrb[0].mxu0
        %818 = vmatprep.mubr.f32.mxu0 0.0
        %819 = vmatmul.mubr.f32.gmra.mrb[0].mxu0 %v609
        %v820 = vpop.f32.mrb[0].mxu0
        %v821 = vadd.f32 %v530, %v820
        %v822 = vpop.f32.mrb[0].mxu0
        %823 = vmatprep.mubr.f32.mxu0 0.0
        %824 = vmatmul.mubr.f32.gmra.mrb[0].mxu0 %v612
        %v825 = vpop.f32.mrb[0].mxu0
        %v826 = vadd.f32 %v530, %v825
        %v827 = vpop.f32.mrb[0].mxu0
        %828 = vmatprep.mubr.f32.mxu0 0.0
        %829 = vmatmul.mubr.f32.gmra.mrb[0].mxu0 %v615
        %v830 = vpop.f32.mrb[0].mxu0
        %v831 = vadd.f32 %v530, %v830
        %v832 = vpop.f32.mrb[0].mxu0
        %833 = vmatprep.mubr.f32.mxu0 0.0
        %834 = vmatmul.mubr.f32.gmra.mrb[0].mxu0 %v618
        %v835 = vpop.f32.mrb[0].mxu0
        %v836 = vadd.f32 %v530, %v835
        %v837 = vpop.f32.mrb[0].mxu0
        %838 = vmatprep.mubr.f32.mxu0 0.0
        %839 = vmatmul.mubr.f32.gmra.mrb[0].mxu0 %v621
        %v840 = vpop.f32.mrb[0].mxu0
        %v841 = vadd.f32 %v530, %v840
        %v842 = vpop.f32.mrb[0].mxu0
        %843 = vmatprep.mubr.f32.mxu0 0.0
        %844 = vmatmul.mubr.f32.gmra.mrb[0].mxu0 %v624
        %v845 = vpop.f32.mrb[0].mxu0
        %v846 = vadd.f32 %v530, %v845
        %v847 = vpop.f32.mrb[0].mxu0
        %848 = vmatprep.mubr.f32.mxu0 0.0
        %849 = vmatmul.mubr.f32.gmra.mrb[0].mxu0 %v627
        %v850 = vpop.f32.mrb[0].mxu0
        %v851 = vadd.f32 %v530, %v850
        %v852 = vpop.f32.mrb[0].mxu0
        %853 = vdwg.mxu0
        %v854 = vld [vmem:[%s6] sm:$0xff]
        %v855 = vld [vmem:[%s6 + $0x8] sm:$0xff]
        %v856 = vld [vmem:[%s6 + $0x10] sm:$0xff]
        %v857 = vld [vmem:[%s6 + $0x18] sm:$0xff]
        %v858 = vld [vmem:[%s6 + $0x20] sm:$0xff]
        %v859 = vld [vmem:[%s6 + $0x28] sm:$0xff]
        %v860 = vld [vmem:[%s6 + $0x30] sm:$0xff]
        %v861 = vld [vmem:[%s6 + $0x38] sm:$0xff]
        %v862 = vld [vmem:[%s6 + $0x40] sm:$0xff]
        %v863 = vld [vmem:[%s6 + $0x48] sm:$0xff]
        %v864 = vld [vmem:[%s6 + $0x50] sm:$0xff]
        %v865 = vld [vmem:[%s6 + $0x58] sm:$0xff]
        %v866 = vld [vmem:[%s6 + $0x60] sm:$0xff]
        %v867 = vld [vmem:[%s6 + $0x68] sm:$0xff]
        %v868 = vld [vmem:[%s6 + $0x70] sm:$0xff]
        %v869 = vld [vmem:[%s6 + $0x78] sm:$0xff]
        %v870 = vld [vmem:[%s6 + $0x80] sm:$0xff]
        %v871 = vld [vmem:[%s6 + $0x88] sm:$0xff]
        %v872 = vld [vmem:[%s6 + $0x90] sm:$0xff]
        %v873 = vld [vmem:[%s6 + $0x98] sm:$0xff]
        %v874 = vld [vmem:[%s6 + $0xa0] sm:$0xff]
        %v875 = vld [vmem:[%s6 + $0xa8] sm:$0xff]
        %v876 = vld [vmem:[%s6 + $0xb0] sm:$0xff]
        %v877 = vld [vmem:[%s6 + $0xb8] sm:$0xff]
        %v878 = vld [vmem:[%s6 + $0xc0] sm:$0xff]
        %v879 = vld [vmem:[%s6 + $0xc8] sm:$0xff]
        %v880 = vld [vmem:[%s6 + $0xd0] sm:$0xff]
        %v881 = vld [vmem:[%s6 + $0xd8] sm:$0xff]
        %v882 = vld [vmem:[%s6 + $0xe0] sm:$0xff]
        %v883 = vld [vmem:[%s6 + $0xe8] sm:$0xff]
        %v884 = vld [vmem:[%s6 + $0xf0] sm:$0xff]
        %v885 = vld [vmem:[%s6 + $0xf8] sm:$0xff]
        %v886 = vld [vmem:[%s6 + $0x100] sm:$0xff]
        %v887 = vld [vmem:[%s6 + $0x108] sm:$0xff]
        %v888 = vld [vmem:[%s6 + $0x110] sm:$0xff]
        %v889 = vld [vmem:[%s6 + $0x118] sm:$0xff]
        %v890 = vld [vmem:[%s6 + $0x120] sm:$0xff]
        %v891 = vld [vmem:[%s6 + $0x128] sm:$0xff]
        %v892 = vld [vmem:[%s6 + $0x130] sm:$0xff]
        %v893 = vld [vmem:[%s6 + $0x138] sm:$0xff]
        %v894 = vld [vmem:[%s6 + $0x140] sm:$0xff]
        %v895 = vld [vmem:[%s6 + $0x148] sm:$0xff]
        %v896 = vld [vmem:[%s6 + $0x150] sm:$0xff]
        %v897 = vld [vmem:[%s6 + $0x158] sm:$0xff]
        %v898 = vld [vmem:[%s6 + $0x160] sm:$0xff]
        %v899 = vld [vmem:[%s6 + $0x168] sm:$0xff]
        %v900 = vld [vmem:[%s6 + $0x170] sm:$0xff]
        %v901 = vld [vmem:[%s6 + $0x178] sm:$0xff]
        %v902 = vld [vmem:[%s6 + $0x180] sm:$0xff]
        %v903 = vld [vmem:[%s6 + $0x188] sm:$0xff]
        %v904 = vld [vmem:[%s6 + $0x190] sm:$0xff]
        %v905 = vld [vmem:[%s6 + $0x198] sm:$0xff]
        %v906 = vld [vmem:[%s6 + $0x1a0] sm:$0xff]
        %v907 = vld [vmem:[%s6 + $0x1a8] sm:$0xff]
        %v908 = vld [vmem:[%s6 + $0x1b0] sm:$0xff]
        %v909 = vld [vmem:[%s6 + $0x1b8] sm:$0xff]
        %v910 = vld [vmem:[%s6 + $0x1c0] sm:$0xff]
        %v911 = vld [vmem:[%s6 + $0x1c8] sm:$0xff]
        %v912 = vld [vmem:[%s6 + $0x1d0] sm:$0xff]
        %v913 = vld [vmem:[%s6 + $0x1d8] sm:$0xff]
        %v914 = vld [vmem:[%s6 + $0x1e0] sm:$0xff]
        %v915 = vld [vmem:[%s6 + $0x1e8] sm:$0xff]
        %v916 = vld [vmem:[%s6 + $0x1f0] sm:$0xff]
        %v917 = vld [vmem:[%s6 + $0x1f8] sm:$0xff]
        %950 = vrot.lane.b32.xlu0 %v696, 124
        %v951 = vpop.permute.xlu0 %950
        %952 = vrot.lane.b32.xlu0 %v701, 124
        %v953 = vpop.permute.xlu0 %952
        %954 = vrot.lane.b32.xlu0 %v706, 124
        %v955 = vpop.permute.xlu0 %954
        %956 = vrot.lane.b32.xlu0 %v711, 124
        %v957 = vpop.permute.xlu0 %956
        %958 = vrot.lane.b32.xlu0 %v716, 124
        %v959 = vpop.permute.xlu0 %958
        %960 = vrot.lane.b32.xlu0 %v721, 124
        %v961 = vpop.permute.xlu0 %960
        %962 = vrot.lane.b32.xlu0 %v726, 124
        %v963 = vpop.permute.xlu0 %962
        %964 = vrot.lane.b32.xlu0 %v731, 124
        %v965 = vpop.permute.xlu0 %964
        %966 = vrot.lane.b32.xlu0 %v736, 124
        %v967 = vpop.permute.xlu0 %966
        %968 = vrot.lane.b32.xlu0 %v741, 124
        %v969 = vpop.permute.xlu0 %968
        %970 = vrot.lane.b32.xlu0 %v746, 124
        %v971 = vpop.permute.xlu0 %970
        %972 = vrot.lane.b32.xlu0 %v751, 124
        %v973 = vpop.permute.xlu0 %972
        %974 = vrot.lane.b32.xlu0 %v756, 124
        %v975 = vpop.permute.xlu0 %974
        %976 = vrot.lane.b32.xlu0 %v761, 124
        %v977 = vpop.permute.xlu0 %976
        %978 = vrot.lane.b32.xlu0 %v766, 124
        %v979 = vpop.permute.xlu0 %978
        %980 = vrot.lane.b32.xlu0 %v771, 124
        %v981 = vpop.permute.xlu0 %980
        %982 = vrot.lane.b32.xlu0 %v776, 124
        %v983 = vpop.permute.xlu0 %982
        %984 = vrot.lane.b32.xlu0 %v781, 124
        %v985 = vpop.permute.xlu0 %984
        %986 = vrot.lane.b32.xlu0 %v786, 124
        %v987 = vpop.permute.xlu0 %986
        %988 = vrot.lane.b32.xlu0 %v791, 124
        %v989 = vpop.permute.xlu0 %988
        %990 = vrot.lane.b32.xlu0 %v796, 124
        %v991 = vpop.permute.xlu0 %990
        %992 = vrot.lane.b32.xlu0 %v801, 124
        %v993 = vpop.permute.xlu0 %992
        %994 = vrot.lane.b32.xlu0 %v806, 124
        %v995 = vpop.permute.xlu0 %994
        %996 = vrot.lane.b32.xlu0 %v811, 124
        %v997 = vpop.permute.xlu0 %996
        %998 = vrot.lane.b32.xlu0 %v816, 124
        %v999 = vpop.permute.xlu0 %998
        %1000 = vrot.lane.b32.xlu0 %v821, 124
        %v1001 = vpop.permute.xlu0 %1000
        %1002 = vrot.lane.b32.xlu0 %v826, 124
        %v1003 = vpop.permute.xlu0 %1002
        %1004 = vrot.lane.b32.xlu0 %v831, 124
        %v1005 = vpop.permute.xlu0 %1004
        %1006 = vrot.lane.b32.xlu0 %v836, 124
        %v1007 = vpop.permute.xlu0 %1006
        %1008 = vrot.lane.b32.xlu0 %v841, 124
        %v1009 = vpop.permute.xlu0 %1008
        %1010 = vrot.lane.b32.xlu0 %v846, 124
        %v1011 = vpop.permute.xlu0 %1010
        %1012 = vrot.lane.b32.xlu0 %v851, 124
        %v1013 = vpop.permute.xlu0 %1012
        %1046 = vmatprep.subr.mxu0 0.0
        %1047 = vmatpush1.msra.mxu0 %v951
        %1048 = vmatprep.subr.mxu0 0.0
        %1049 = vmatpush1.msra.mxu0 %v953
        %1050 = vmatprep.subr.mxu0 0.0
        %1051 = vmatpush1.msra.mxu0 %v955
        %1052 = vmatprep.subr.mxu0 0.0
        %1053 = vmatpush1.msra.mxu0 %v957
        %1054 = vmatprep.subr.mxu0 0.0
        %1055 = vmatpush1.msra.mxu0 %v959
        %1056 = vmatprep.subr.mxu0 0.0
        %1057 = vmatpush1.msra.mxu0 %v961
        %1058 = vmatprep.subr.mxu0 0.0
        %1059 = vmatpush1.msra.mxu0 %v963
        %1060 = vmatprep.subr.mxu0 0.0
        %1061 = vmatpush1.msra.mxu0 %v965
        %1062 = vmatprep.subr.mxu0 0.0
        %1063 = vmatpush1.msra.mxu0 %v967
        %1064 = vmatprep.subr.mxu0 0.0
        %1065 = vmatpush1.msra.mxu0 %v969
        %1066 = vmatprep.subr.mxu0 0.0
        %1067 = vmatpush1.msra.mxu0 %v971
        %1068 = vmatprep.subr.mxu0 0.0
        %1069 = vmatpush1.msra.mxu0 %v973
        %1070 = vmatprep.subr.mxu0 0.0
        %1071 = vmatpush1.msra.mxu0 %v975
        %1072 = vmatprep.subr.mxu0 0.0
        %1073 = vmatpush1.msra.mxu0 %v977
        %1074 = vmatprep.subr.mxu0 0.0
        %1075 = vmatpush1.msra.mxu0 %v979
        %1076 = vmatprep.subr.mxu0 0.0
        %1077 = vmatpush1.msra.mxu0 %v981
        %1078 = vmatprep.subr.mxu0 0.0
        %1079 = vmatpush1.msra.mxu0 %v983
        %1080 = vmatprep.subr.mxu0 0.0
        %1081 = vmatpush1.msra.mxu0 %v985
        %1082 = vmatprep.subr.mxu0 0.0
        %1083 = vmatpush1.msra.mxu0 %v987
        %1084 = vmatprep.subr.mxu0 0.0
        %1085 = vmatpush1.msra.mxu0 %v989
        %1086 = vmatprep.subr.mxu0 0.0
        %1087 = vmatpush1.msra.mxu0 %v991
        %1088 = vmatprep.subr.mxu0 0.0
        %1089 = vmatpush1.msra.mxu0 %v993
        %1090 = vmatprep.subr.mxu0 0.0
        %1091 = vmatpush1.msra.mxu0 %v995
        %1092 = vmatprep.subr.mxu0 0.0
        %1093 = vmatpush1.msra.mxu0 %v997
        %1094 = vmatprep.subr.mxu0 0.0
        %1095 = vmatpush1.msra.mxu0 %v999
        %1096 = vmatprep.subr.mxu0 0.0
        %1097 = vmatpush1.msra.mxu0 %v1001
        %1098 = vmatprep.subr.mxu0 0.0
        %1099 = vmatpush1.msra.mxu0 %v1003
        %1100 = vmatprep.subr.mxu0 0.0
        %1101 = vmatpush1.msra.mxu0 %v1005
        %1102 = vmatprep.subr.mxu0 0.0
        %1103 = vmatpush1.msra.mxu0 %v1007
        %1104 = vmatprep.subr.mxu0 0.0
        %1105 = vmatpush1.msra.mxu0 %v1009
        %1106 = vmatprep.subr.mxu0 0.0
        %1107 = vmatpush1.msra.mxu0 %v1011
        %1108 = vmatprep.subr.mxu0 0.0
        %1109 = vmatpush1.msra.mxu0 %v1013
        %1110 = vmatprep.mubr.f32.mxu0 %v855
        %1111 = vmatmul.mubr.f32.gmra.mrb[0].mxu0 %v854
        %v1112 = vpop.f32.mrb[0].mxu0
        %v1113 = vadd.f32 0.0, %v1112
        %v1114 = vpop.f32.mrb[0].mxu0
        %1115 = vmatprep.mubr.f32.mxu0 %v857
        %1116 = vmatmul.mubr.f32.gmra.mrb[0].mxu0 %v856
        %v1117 = vpop.f32.mrb[0].mxu0
        %v1118 = vadd.f32 0.0, %v1117
        %v1119 = vpop.f32.mrb[0].mxu0
        %1120 = vmatprep.mubr.f32.mxu0 %v859
        %1121 = vmatmul.mubr.f32.gmra.mrb[0].mxu0 %v858
        %v1122 = vpop.f32.mrb[0].mxu0
        %v1123 = vadd.f32 0.0, %v1122
        %v1124 = vpop.f32.mrb[0].mxu0
        %1125 = vmatprep.mubr.f32.mxu0 %v861
        %1126 = vmatmul.mubr.f32.gmra.mrb[0].mxu0 %v860
        %v1127 = vpop.f32.mrb[0].mxu0
        %v1128 = vadd.f32 0.0, %v1127
        %v1129 = vpop.f32.mrb[0].mxu0
        %1130 = vmatprep.mubr.f32.mxu0 %v863
        %1131 = vmatmul.mubr.f32.gmra.mrb[0].mxu0 %v862
        %v1132 = vpop.f32.mrb[0].mxu0
        %v1133 = vadd.f32 0.0, %v1132
        %v1134 = vpop.f32.mrb[0].mxu0
        %1135 = vmatprep.mubr.f32.mxu0 %v865
        %1136 = vmatmul.mubr.f32.gmra.mrb[0].mxu0 %v864
        %v1137 = vpop.f32.mrb[0].mxu0
        %v1138 = vadd.f32 0.0, %v1137
        %v1139 = vpop.f32.mrb[0].mxu0
        %1140 = vmatprep.mubr.f32.mxu0 %v867
        %1141 = vmatmul.mubr.f32.gmra.mrb[0].mxu0 %v866
        %v1142 = vpop.f32.mrb[0].mxu0
        %v1143 = vadd.f32 0.0, %v1142
        %v1144 = vpop.f32.mrb[0].mxu0
        %1145 = vmatprep.mubr.f32.mxu0 %v869
        %1146 = vmatmul.mubr.f32.gmra.mrb[0].mxu0 %v868
        %v1147 = vpop.f32.mrb[0].mxu0
        %v1148 = vadd.f32 0.0, %v1147
        %v1149 = vpop.f32.mrb[0].mxu0
        %1150 = vmatprep.mubr.f32.mxu0 %v871
        %1151 = vmatmul.mubr.f32.gmra.mrb[0].mxu0 %v870
        %v1152 = vpop.f32.mrb[0].mxu0
        %v1153 = vadd.f32 0.0, %v1152
        %v1154 = vpop.f32.mrb[0].mxu0
        %1155 = vmatprep.mubr.f32.mxu0 %v873
        %1156 = vmatmul.mubr.f32.gmra.mrb[0].mxu0 %v872
        %v1157 = vpop.f32.mrb[0].mxu0
        %v1158 = vadd.f32 0.0, %v1157
        %v1159 = vpop.f32.mrb[0].mxu0
        %1160 = vmatprep.mubr.f32.mxu0 %v875
        %1161 = vmatmul.mubr.f32.gmra.mrb[0].mxu0 %v874
        %v1162 = vpop.f32.mrb[0].mxu0
        %v1163 = vadd.f32 0.0, %v1162
        %v1164 = vpop.f32.mrb[0].mxu0
        %1165 = vmatprep.mubr.f32.mxu0 %v877
        %1166 = vmatmul.mubr.f32.gmra.mrb[0].mxu0 %v876
        %v1167 = vpop.f32.mrb[0].mxu0
        %v1168 = vadd.f32 0.0, %v1167
        %v1169 = vpop.f32.mrb[0].mxu0
        %1170 = vmatprep.mubr.f32.mxu0 %v879
        %1171 = vmatmul.mubr.f32.gmra.mrb[0].mxu0 %v878
        %v1172 = vpop.f32.mrb[0].mxu0
        %v1173 = vadd.f32 0.0, %v1172
        %v1174 = vpop.f32.mrb[0].mxu0
        %1175 = vmatprep.mubr.f32.mxu0 %v881
        %1176 = vmatmul.mubr.f32.gmra.mrb[0].mxu0 %v880
        %v1177 = vpop.f32.mrb[0].mxu0
        %v1178 = vadd.f32 0.0, %v1177
        %v1179 = vpop.f32.mrb[0].mxu0
        %1180 = vmatprep.mubr.f32.mxu0 %v883
        %1181 = vmatmul.mubr.f32.gmra.mrb[0].mxu0 %v882
        %v1182 = vpop.f32.mrb[0].mxu0
        %v1183 = vadd.f32 0.0, %v1182
        %v1184 = vpop.f32.mrb[0].mxu0
        %1185 = vmatprep.mubr.f32.mxu0 %v885
        %1186 = vmatmul.mubr.f32.gmra.mrb[0].mxu0 %v884
        %v1187 = vpop.f32.mrb[0].mxu0
        %v1188 = vadd.f32 0.0, %v1187
        %v1189 = vpop.f32.mrb[0].mxu0
        %1190 = vmatprep.mubr.f32.mxu0 %v887
        %1191 = vmatmul.mubr.f32.gmra.mrb[0].mxu0 %v886
        %v1192 = vpop.f32.mrb[0].mxu0
        %v1193 = vadd.f32 0.0, %v1192
        %v1194 = vpop.f32.mrb[0].mxu0
        %1195 = vmatprep.mubr.f32.mxu0 %v889
        %1196 = vmatmul.mubr.f32.gmra.mrb[0].mxu0 %v888
        %v1197 = vpop.f32.mrb[0].mxu0
        %v1198 = vadd.f32 0.0, %v1197
        %v1199 = vpop.f32.mrb[0].mxu0
        %1200 = vmatprep.mubr.f32.mxu0 %v891
        %1201 = vmatmul.mubr.f32.gmra.mrb[0].mxu0 %v890
        %v1202 = vpop.f32.mrb[0].mxu0
        %v1203 = vadd.f32 0.0, %v1202
        %v1204 = vpop.f32.mrb[0].mxu0
        %1205 = vmatprep.mubr.f32.mxu0 %v893
        %1206 = vmatmul.mubr.f32.gmra.mrb[0].mxu0 %v892
        %v1207 = vpop.f32.mrb[0].mxu0
        %v1208 = vadd.f32 0.0, %v1207
        %v1209 = vpop.f32.mrb[0].mxu0
        %1210 = vmatprep.mubr.f32.mxu0 %v895
        %1211 = vmatmul.mubr.f32.gmra.mrb[0].mxu0 %v894
        %v1212 = vpop.f32.mrb[0].mxu0
        %v1213 = vadd.f32 0.0, %v1212
        %v1214 = vpop.f32.mrb[0].mxu0
        %1215 = vmatprep.mubr.f32.mxu0 %v897
        %1216 = vmatmul.mubr.f32.gmra.mrb[0].mxu0 %v896
        %v1217 = vpop.f32.mrb[0].mxu0
        %v1218 = vadd.f32 0.0, %v1217
        %v1219 = vpop.f32.mrb[0].mxu0
        %1220 = vmatprep.mubr.f32.mxu0 %v899
        %1221 = vmatmul.mubr.f32.gmra.mrb[0].mxu0 %v898
        %v1222 = vpop.f32.mrb[0].mxu0
        %v1223 = vadd.f32 0.0, %v1222
        %v1224 = vpop.f32.mrb[0].mxu0
        %1225 = vmatprep.mubr.f32.mxu0 %v901
        %1226 = vmatmul.mubr.f32.gmra.mrb[0].mxu0 %v900
        %v1227 = vpop.f32.mrb[0].mxu0
        %v1228 = vadd.f32 0.0, %v1227
        %v1229 = vpop.f32.mrb[0].mxu0
        %1230 = vmatprep.mubr.f32.mxu0 %v903
        %1231 = vmatmul.mubr.f32.gmra.mrb[0].mxu0 %v902
        %v1232 = vpop.f32.mrb[0].mxu0
        %v1233 = vadd.f32 0.0, %v1232
        %v1234 = vpop.f32.mrb[0].mxu0
        %1235 = vmatprep.mubr.f32.mxu0 %v905
        %1236 = vmatmul.mubr.f32.gmra.mrb[0].mxu0 %v904
        %v1237 = vpop.f32.mrb[0].mxu0
        %v1238 = vadd.f32 0.0, %v1237
        %v1239 = vpop.f32.mrb[0].mxu0
        %1240 = vmatprep.mubr.f32.mxu0 %v907
        %1241 = vmatmul.mubr.f32.gmra.mrb[0].mxu0 %v906
        %v1242 = vpop.f32.mrb[0].mxu0
        %v1243 = vadd.f32 0.0, %v1242
        %v1244 = vpop.f32.mrb[0].mxu0
        %1245 = vmatprep.mubr.f32.mxu0 %v909
        %1246 = vmatmul.mubr.f32.gmra.mrb[0].mxu0 %v908
        %v1247 = vpop.f32.mrb[0].mxu0
        %v1248 = vadd.f32 0.0, %v1247
        %v1249 = vpop.f32.mrb[0].mxu0
        %1250 = vmatprep.mubr.f32.mxu0 %v911
        %1251 = vmatmul.mubr.f32.gmra.mrb[0].mxu0 %v910
        %v1252 = vpop.f32.mrb[0].mxu0
        %v1253 = vadd.f32 0.0, %v1252
        %v1254 = vpop.f32.mrb[0].mxu0
        %1255 = vmatprep.mubr.f32.mxu0 %v913
        %1256 = vmatmul.mubr.f32.gmra.mrb[0].mxu0 %v912
        %v1257 = vpop.f32.mrb[0].mxu0
        %v1258 = vadd.f32 0.0, %v1257
        %v1259 = vpop.f32.mrb[0].mxu0
        %1260 = vmatprep.mubr.f32.mxu0 %v915
        %1261 = vmatmul.mubr.f32.gmra.mrb[0].mxu0 %v914
        %v1262 = vpop.f32.mrb[0].mxu0
        %v1263 = vadd.f32 0.0, %v1262
        %v1264 = vpop.f32.mrb[0].mxu0
        %1265 = vmatprep.mubr.f32.mxu0 %v917
        %1266 = vmatmul.mubr.f32.gmra.mrb[0].mxu0 %v916
        %v1267 = vpop.f32.mrb[0].mxu0
        %v1268 = vadd.f32 0.0, %v1267
        %v1269 = vpop.f32.mrb[0].mxu0
        %1270 = vdwg.mxu0
        %v1271 = vmax.f32 %v1113, %v1153
        %v1272 = vmax.f32 %v1118, %v1158
        %v1273 = vmax.f32 %v1123, %v1163
        %v1274 = vmax.f32 %v1128, %v1168
        %v1275 = vmax.f32 %v1133, %v1173
        %v1276 = vmax.f32 %v1138, %v1178
        %v1277 = vmax.f32 %v1143, %v1183
        %v1278 = vmax.f32 %v1148, %v1188
        %v1279 = vmax.f32 %v1193, %v1233
        %v1280 = vmax.f32 %v1198, %v1238
        %v1281 = vmax.f32 %v1203, %v1243
        %v1282 = vmax.f32 %v1208, %v1248
        %v1283 = vmax.f32 %v1213, %v1253
        %v1284 = vmax.f32 %v1218, %v1258
        %v1285 = vmax.f32 %v1223, %v1263
        %v1286 = vmax.f32 %v1228, %v1268
        %v1287 = vmax.f32 %v1271, %v1279
        %v1288 = vmax.f32 %v1272, %v1280
        %v1289 = vmax.f32 %v1273, %v1281
        %v1290 = vmax.f32 %v1274, %v1282
        %v1291 = vmax.f32 %v1275, %v1283
        %v1292 = vmax.f32 %v1276, %v1284
        %v1293 = vmax.f32 %v1277, %v1285
        %v1294 = vmax.f32 %v1278, %v1286
        %vm1295 = vcmask 31744
        %v1296 = vsel %vm1295, %v696, 0
        %v1298 = vsel %vm1295, %v701, 0
        %v1300 = vsel %vm1295, %v706, 0
        %v1302 = vsel %vm1295, %v711, 0
        %v1304 = vsel %vm1295, %v716, 0
        %v1306 = vsel %vm1295, %v721, 0
        %v1308 = vsel %vm1295, %v726, 0
        %v1310 = vsel %vm1295, %v731, 0
        %v1312 = vsel %vm1295, %v736, 0
        %v1314 = vsel %vm1295, %v741, 0
        %v1316 = vsel %vm1295, %v746, 0
        %v1318 = vsel %vm1295, %v751, 0
        %v1320 = vsel %vm1295, %v756, 0
        %v1322 = vsel %vm1295, %v761, 0
        %v1324 = vsel %vm1295, %v766, 0
        %v1326 = vsel %vm1295, %v771, 0
        %v1328 = vsel %vm1295, %v776, 0
        %v1330 = vsel %vm1295, %v781, 0
        %v1332 = vsel %vm1295, %v786, 0
        %v1334 = vsel %vm1295, %v791, 0
        %v1336 = vsel %vm1295, %v796, 0
        %v1338 = vsel %vm1295, %v801, 0
        %v1340 = vsel %vm1295, %v806, 0
        %v1342 = vsel %vm1295, %v811, 0
        %v1344 = vsel %vm1295, %v816, 0
        %v1346 = vsel %vm1295, %v821, 0
        %v1348 = vsel %vm1295, %v826, 0
        %v1350 = vsel %vm1295, %v831, 0
        %v1352 = vsel %vm1295, %v836, 0
        %v1354 = vsel %vm1295, %v841, 0
        %v1356 = vsel %vm1295, %v846, 0
        %v1358 = vsel %vm1295, %v851, 0
        %v1361 = vsel %vm1295, %v1287, 0
        %v1364 = vsel %vm1295, %v1288, 0
        %v1367 = vsel %vm1295, %v1289, 0
        %v1370 = vsel %vm1295, %v1290, 0
        %v1373 = vsel %vm1295, %v1291, 0
        %v1376 = vsel %vm1295, %v1292, 0
        %v1379 = vsel %vm1295, %v1293, 0
        %v1382 = vsel %vm1295, %v1294, 0
        %1384 = vmatprep.subr.mxu0 0.0
        %1385 = vmatpush1.xpose.msra.mxu0 %v1361
        %1386 = vmatprep.subr.mxu0 0.0
        %1387 = vmatpush1.xpose.msra.mxu0 %v1364
        %1388 = vmatprep.subr.mxu0 0.0
        %1389 = vmatpush1.xpose.msra.mxu0 %v1367
        %1390 = vmatprep.subr.mxu0 0.0
        %1391 = vmatpush1.xpose.msra.mxu0 %v1370
        %1392 = vmatprep.subr.mxu0 0.0
        %1393 = vmatpush1.xpose.msra.mxu0 %v1373
        %1394 = vmatprep.subr.mxu0 0.0
        %1395 = vmatpush1.xpose.msra.mxu0 %v1376
        %1396 = vmatprep.subr.mxu0 0.0
        %1397 = vmatpush1.xpose.msra.mxu0 %v1379
        %1398 = vmatprep.subr.mxu0 0.0
        %1399 = vmatpush1.xpose.msra.mxu0 %v1382
        %1400 = vmatprep.subr.mxu0 0.0
        %1401 = vmatpush1.xpose.msra.mxu0 0.0
        %1402 = vmatprep.subr.mxu0 0.0
        %1403 = vmatpush1.xpose.msra.mxu0 0.0
        %1404 = vmatprep.subr.mxu0 0.0
        %1405 = vmatpush1.xpose.msra.mxu0 0.0
        %1406 = vmatprep.subr.mxu0 0.0
        %1407 = vmatpush1.xpose.msra.mxu0 0.0
        %1408 = vmatprep.subr.mxu0 0.0
        %1409 = vmatpush1.xpose.msra.mxu0 0.0
        %1410 = vmatprep.subr.mxu0 0.0
        %1411 = vmatpush1.xpose.msra.mxu0 0.0
        %1412 = vmatprep.subr.mxu0 0.0
        %1413 = vmatpush1.xpose.msra.mxu0 0.0
        %1414 = vmatprep.subr.mxu0 0.0
        %1415 = vmatpush1.xpose.msra.mxu0 0.0
        %1416 = vmatprep.subr.mxu0 0.0
        %1417 = vmatpush1.xpose.msra.mxu0 0.0
        %1418 = vmatprep.subr.mxu0 0.0
        %1419 = vmatpush1.xpose.msra.mxu0 0.0
        %1420 = vmatprep.subr.mxu0 0.0
        %1421 = vmatpush1.xpose.msra.mxu0 0.0
        %1422 = vmatprep.subr.mxu0 0.0
        %1423 = vmatpush1.xpose.msra.mxu0 0.0
        %1424 = vmatprep.subr.mxu0 0.0
        %1425 = vmatpush1.xpose.msra.mxu0 0.0
        %1426 = vmatprep.subr.mxu0 0.0
        %1427 = vmatpush1.xpose.msra.mxu0 0.0
        %1428 = vmatprep.subr.mxu0 0.0
        %1429 = vmatpush1.xpose.msra.mxu0 0.0
        %1430 = vmatprep.subr.mxu0 0.0
        %1431 = vmatpush1.xpose.msra.mxu0 0.0
        %1432 = vmatprep.subr.mxu0 0.0
        %1433 = vmatpush1.xpose.msra.mxu0 0.0
        %1434 = vmatprep.subr.mxu0 0.0
        %1435 = vmatpush1.xpose.msra.mxu0 0.0
        %1436 = vmatprep.subr.mxu0 0.0
        %1437 = vmatpush1.xpose.msra.mxu0 0.0
        %1438 = vmatprep.subr.mxu0 0.0
        %1439 = vmatpush1.xpose.msra.mxu0 0.0
        %1440 = vmatprep.subr.mxu0 0.0
        %1441 = vmatpush1.xpose.msra.mxu0 0.0
        %1442 = vmatprep.subr.mxu0 0.0
        %1443 = vmatpush1.xpose.msra.mxu0 0.0
        %1444 = vmatprep.subr.mxu0 0.0
        %1445 = vmatpush1.xpose.msra.mxu0 0.0
        %1446 = vmatprep.subr.mxu0 0.0
        %1447 = vmatpush1.xpose.msra.mxu0 0.0
        %1448 = vmatprep.mubr.f32.mxu0 0.0
        %1449 = vmatmul.mubr.f32.gmra.mrb[0].mxu0 %v1296
        %v1450 = vpop.f32.mrb[0].mxu0
        %v1451 = vadd.f32 0.0, %v1450
        %v1452 = vpop.f32.mrb[0].mxu0
        %1453 = vmatprep.mubr.f32.mxu0 0.0
        %1454 = vmatmul.mubr.f32.gmra.mrb[0].mxu0 %v1298
        %v1455 = vpop.f32.mrb[0].mxu0
        %v1456 = vadd.f32 0.0, %v1455
        %v1457 = vpop.f32.mrb[0].mxu0
        %1458 = vmatprep.mubr.f32.mxu0 0.0
        %1459 = vmatmul.mubr.f32.gmra.mrb[0].mxu0 %v1300
        %v1460 = vpop.f32.mrb[0].mxu0
        %v1461 = vadd.f32 0.0, %v1460
        %v1462 = vpop.f32.mrb[0].mxu0
        %1463 = vmatprep.mubr.f32.mxu0 0.0
        %1464 = vmatmul.mubr.f32.gmra.mrb[0].mxu0 %v1302
        %v1465 = vpop.f32.mrb[0].mxu0
        %v1466 = vadd.f32 0.0, %v1465
        %v1467 = vpop.f32.mrb[0].mxu0
        %1468 = vmatprep.mubr.f32.mxu0 0.0
        %1469 = vmatmul.mubr.f32.gmra.mrb[0].mxu0 %v1304
        %v1470 = vpop.f32.mrb[0].mxu0
        %v1471 = vadd.f32 0.0, %v1470
        %v1472 = vpop.f32.mrb[0].mxu0
        %1473 = vmatprep.mubr.f32.mxu0 0.0
        %1474 = vmatmul.mubr.f32.gmra.mrb[0].mxu0 %v1306
        %v1475 = vpop.f32.mrb[0].mxu0
        %v1476 = vadd.f32 0.0, %v1475
        %v1477 = vpop.f32.mrb[0].mxu0
        %1478 = vmatprep.mubr.f32.mxu0 0.0
        %1479 = vmatmul.mubr.f32.gmra.mrb[0].mxu0 %v1308
        %v1480 = vpop.f32.mrb[0].mxu0
        %v1481 = vadd.f32 0.0, %v1480
        %v1482 = vpop.f32.mrb[0].mxu0
        %1483 = vmatprep.mubr.f32.mxu0 0.0
        %1484 = vmatmul.mubr.f32.gmra.mrb[0].mxu0 %v1310
        %v1485 = vpop.f32.mrb[0].mxu0
        %v1486 = vadd.f32 0.0, %v1485
        %v1487 = vpop.f32.mrb[0].mxu0
        %1488 = vmatprep.mubr.f32.mxu0 0.0
        %1489 = vmatmul.mubr.f32.gmra.mrb[0].mxu0 %v1312
        %v1490 = vpop.f32.mrb[0].mxu0
        %v1491 = vadd.f32 0.0, %v1490
        %v1492 = vpop.f32.mrb[0].mxu0
        %1493 = vmatprep.mubr.f32.mxu0 0.0
        %1494 = vmatmul.mubr.f32.gmra.mrb[0].mxu0 %v1314
        %v1495 = vpop.f32.mrb[0].mxu0
        %v1496 = vadd.f32 0.0, %v1495
        %v1497 = vpop.f32.mrb[0].mxu0
        %1498 = vmatprep.mubr.f32.mxu0 0.0
        %1499 = vmatmul.mubr.f32.gmra.mrb[0].mxu0 %v1316
        %v1500 = vpop.f32.mrb[0].mxu0
        %v1501 = vadd.f32 0.0, %v1500
        %v1502 = vpop.f32.mrb[0].mxu0
        %1503 = vmatprep.mubr.f32.mxu0 0.0
        %1504 = vmatmul.mubr.f32.gmra.mrb[0].mxu0 %v1318
        %v1505 = vpop.f32.mrb[0].mxu0
        %v1506 = vadd.f32 0.0, %v1505
        %v1507 = vpop.f32.mrb[0].mxu0
        %1508 = vmatprep.mubr.f32.mxu0 0.0
        %1509 = vmatmul.mubr.f32.gmra.mrb[0].mxu0 %v1320
        %v1510 = vpop.f32.mrb[0].mxu0
        %v1511 = vadd.f32 0.0, %v1510
        %v1512 = vpop.f32.mrb[0].mxu0
        %1513 = vmatprep.mubr.f32.mxu0 0.0
        %1514 = vmatmul.mubr.f32.gmra.mrb[0].mxu0 %v1322
        %v1515 = vpop.f32.mrb[0].mxu0
        %v1516 = vadd.f32 0.0, %v1515
        %v1517 = vpop.f32.mrb[0].mxu0
        %1518 = vmatprep.mubr.f32.mxu0 0.0
        %1519 = vmatmul.mubr.f32.gmra.mrb[0].mxu0 %v1324
        %v1520 = vpop.f32.mrb[0].mxu0
        %v1521 = vadd.f32 0.0, %v1520
        %v1522 = vpop.f32.mrb[0].mxu0
        %1523 = vmatprep.mubr.f32.mxu0 0.0
        %1524 = vmatmul.mubr.f32.gmra.mrb[0].mxu0 %v1326
        %v1525 = vpop.f32.mrb[0].mxu0
        %v1526 = vadd.f32 0.0, %v1525
        %v1527 = vpop.f32.mrb[0].mxu0
        %1528 = vmatprep.mubr.f32.mxu0 0.0
        %1529 = vmatmul.mubr.f32.gmra.mrb[0].mxu0 %v1328
        %v1530 = vpop.f32.mrb[0].mxu0
        %v1531 = vadd.f32 0.0, %v1530
        %v1532 = vpop.f32.mrb[0].mxu0
        %1533 = vmatprep.mubr.f32.mxu0 0.0
        %1534 = vmatmul.mubr.f32.gmra.mrb[0].mxu0 %v1330
        %v1535 = vpop.f32.mrb[0].mxu0
        %v1536 = vadd.f32 0.0, %v1535
        %v1537 = vpop.f32.mrb[0].mxu0
        %1538 = vmatprep.mubr.f32.mxu0 0.0
        %1539 = vmatmul.mubr.f32.gmra.mrb[0].mxu0 %v1332
        %v1540 = vpop.f32.mrb[0].mxu0
        %v1541 = vadd.f32 0.0, %v1540
        %v1542 = vpop.f32.mrb[0].mxu0
        %1543 = vmatprep.mubr.f32.mxu0 0.0
        %1544 = vmatmul.mubr.f32.gmra.mrb[0].mxu0 %v1334
        %v1545 = vpop.f32.mrb[0].mxu0
        %v1546 = vadd.f32 0.0, %v1545
        %v1547 = vpop.f32.mrb[0].mxu0
        %1548 = vmatprep.mubr.f32.mxu0 0.0
        %1549 = vmatmul.mubr.f32.gmra.mrb[0].mxu0 %v1336
        %v1550 = vpop.f32.mrb[0].mxu0
        %v1551 = vadd.f32 0.0, %v1550
        %v1552 = vpop.f32.mrb[0].mxu0
        %1553 = vmatprep.mubr.f32.mxu0 0.0
        %1554 = vmatmul.mubr.f32.gmra.mrb[0].mxu0 %v1338
        %v1555 = vpop.f32.mrb[0].mxu0
        %v1556 = vadd.f32 0.0, %v1555
        %v1557 = vpop.f32.mrb[0].mxu0
        %1558 = vmatprep.mubr.f32.mxu0 0.0
        %1559 = vmatmul.mubr.f32.gmra.mrb[0].mxu0 %v1340
        %v1560 = vpop.f32.mrb[0].mxu0
        %v1561 = vadd.f32 0.0, %v1560
        %v1562 = vpop.f32.mrb[0].mxu0
        %1563 = vmatprep.mubr.f32.mxu0 0.0
        %1564 = vmatmul.mubr.f32.gmra.mrb[0].mxu0 %v1342
        %v1565 = vpop.f32.mrb[0].mxu0
        %v1566 = vadd.f32 0.0, %v1565
        %v1567 = vpop.f32.mrb[0].mxu0
        %1568 = vmatprep.mubr.f32.mxu0 0.0
        %1569 = vmatmul.mubr.f32.gmra.mrb[0].mxu0 %v1344
        %v1570 = vpop.f32.mrb[0].mxu0
        %v1571 = vadd.f32 0.0, %v1570
        %v1572 = vpop.f32.mrb[0].mxu0
        %1573 = vmatprep.mubr.f32.mxu0 0.0
        %1574 = vmatmul.mubr.f32.gmra.mrb[0].mxu0 %v1346
        %v1575 = vpop.f32.mrb[0].mxu0
        %v1576 = vadd.f32 0.0, %v1575
        %v1577 = vpop.f32.mrb[0].mxu0
        %1578 = vmatprep.mubr.f32.mxu0 0.0
        %1579 = vmatmul.mubr.f32.gmra.mrb[0].mxu0 %v1348
        %v1580 = vpop.f32.mrb[0].mxu0
        %v1581 = vadd.f32 0.0, %v1580
        %v1582 = vpop.f32.mrb[0].mxu0
        %1583 = vmatprep.mubr.f32.mxu0 0.0
        %1584 = vmatmul.mubr.f32.gmra.mrb[0].mxu0 %v1350
        %v1585 = vpop.f32.mrb[0].mxu0
        %v1586 = vadd.f32 0.0, %v1585
        %v1587 = vpop.f32.mrb[0].mxu0
        %1588 = vmatprep.mubr.f32.mxu0 0.0
        %1589 = vmatmul.mubr.f32.gmra.mrb[0].mxu0 %v1352
        %v1590 = vpop.f32.mrb[0].mxu0
        %v1591 = vadd.f32 0.0, %v1590
        %v1592 = vpop.f32.mrb[0].mxu0
        %1593 = vmatprep.mubr.f32.mxu0 0.0
        %1594 = vmatmul.mubr.f32.gmra.mrb[0].mxu0 %v1354
        %v1595 = vpop.f32.mrb[0].mxu0
        %v1596 = vadd.f32 0.0, %v1595
        %v1597 = vpop.f32.mrb[0].mxu0
        %1598 = vmatprep.mubr.f32.mxu0 0.0
        %1599 = vmatmul.mubr.f32.gmra.mrb[0].mxu0 %v1356
        %v1600 = vpop.f32.mrb[0].mxu0
        %v1601 = vadd.f32 0.0, %v1600
        %v1602 = vpop.f32.mrb[0].mxu0
        %1603 = vmatprep.mubr.f32.mxu0 0.0
        %1604 = vmatmul.mubr.f32.gmra.mrb[0].mxu0 %v1358
        %v1605 = vpop.f32.mrb[0].mxu0
        %v1606 = vadd.f32 0.0, %v1605
        %v1607 = vpop.f32.mrb[0].mxu0
        %1608 = vdwg.mxu0
        %vm1609 = vcmask 523264
        %v1610 = vsel %vm1609, %v1451, -inf
        %1611 = vmax.xlane.f32.xlu0 %v1610
        %v1612 = vpop.xlane.xlu0 %1611
        %v1613 = vsel %vm1609, %v1456, -inf
        %1614 = vmax.xlane.f32.xlu0 %v1613
        %v1615 = vpop.xlane.xlu0 %1614
        %v1616 = vsel %vm1609, %v1461, -inf
        %1617 = vmax.xlane.f32.xlu0 %v1616
        %v1618 = vpop.xlane.xlu0 %1617
        %v1619 = vsel %vm1609, %v1466, -inf
        %1620 = vmax.xlane.f32.xlu0 %v1619
        %v1621 = vpop.xlane.xlu0 %1620
        %v1622 = vsel %vm1609, %v1471, -inf
        %1623 = vmax.xlane.f32.xlu0 %v1622
        %v1624 = vpop.xlane.xlu0 %1623
        %v1625 = vsel %vm1609, %v1476, -inf
        %1626 = vmax.xlane.f32.xlu0 %v1625
        %v1627 = vpop.xlane.xlu0 %1626
        %v1628 = vsel %vm1609, %v1481, -inf
        %1629 = vmax.xlane.f32.xlu0 %v1628
        %v1630 = vpop.xlane.xlu0 %1629
        %v1631 = vsel %vm1609, %v1486, -inf
        %1632 = vmax.xlane.f32.xlu0 %v1631
        %v1633 = vpop.xlane.xlu0 %1632
        %v1634 = vsel %vm1609, %v1491, -inf
        %1635 = vmax.xlane.f32.xlu0 %v1634
        %v1636 = vpop.xlane.xlu0 %1635
        %v1637 = vsel %vm1609, %v1496, -inf
        %1638 = vmax.xlane.f32.xlu0 %v1637
        %v1639 = vpop.xlane.xlu0 %1638
        %v1640 = vsel %vm1609, %v1501, -inf
        %1641 = vmax.xlane.f32.xlu0 %v1640
        %v1642 = vpop.xlane.xlu0 %1641
        %v1643 = vsel %vm1609, %v1506, -inf
        %1644 = vmax.xlane.f32.xlu0 %v1643
        %v1645 = vpop.xlane.xlu0 %1644
        %v1646 = vsel %vm1609, %v1511, -inf
        %1647 = vmax.xlane.f32.xlu0 %v1646
        %v1648 = vpop.xlane.xlu0 %1647
        %v1649 = vsel %vm1609, %v1516, -inf
        %1650 = vmax.xlane.f32.xlu0 %v1649
        %v1651 = vpop.xlane.xlu0 %1650
        %v1652 = vsel %vm1609, %v1521, -inf
        %1653 = vmax.xlane.f32.xlu0 %v1652
        %v1654 = vpop.xlane.xlu0 %1653
        %v1655 = vsel %vm1609, %v1526, -inf
        %1656 = vmax.xlane.f32.xlu0 %v1655
        %v1657 = vpop.xlane.xlu0 %1656
        %v1658 = vsel %vm1609, %v1531, -inf
        %1659 = vmax.xlane.f32.xlu0 %v1658
        %v1660 = vpop.xlane.xlu0 %1659
        %v1661 = vsel %vm1609, %v1536, -inf
        %1662 = vmax.xlane.f32.xlu0 %v1661
        %v1663 = vpop.xlane.xlu0 %1662
        %v1664 = vsel %vm1609, %v1541, -inf
        %1665 = vmax.xlane.f32.xlu0 %v1664
        %v1666 = vpop.xlane.xlu0 %1665
        %v1667 = vsel %vm1609, %v1546, -inf
        %1668 = vmax.xlane.f32.xlu0 %v1667
        %v1669 = vpop.xlane.xlu0 %1668
        %v1670 = vsel %vm1609, %v1551, -inf
        %1671 = vmax.xlane.f32.xlu0 %v1670
        %v1672 = vpop.xlane.xlu0 %1671
        %v1673 = vsel %vm1609, %v1556, -inf
        %1674 = vmax.xlane.f32.xlu0 %v1673
        %v1675 = vpop.xlane.xlu0 %1674
        %v1676 = vsel %vm1609, %v1561, -inf
        %1677 = vmax.xlane.f32.xlu0 %v1676
        %v1678 = vpop.xlane.xlu0 %1677
        %v1679 = vsel %vm1609, %v1566, -inf
        %1680 = vmax.xlane.f32.xlu0 %v1679
        %v1681 = vpop.xlane.xlu0 %1680
        %v1682 = vsel %vm1609, %v1571, -inf
        %1683 = vmax.xlane.f32.xlu0 %v1682
        %v1684 = vpop.xlane.xlu0 %1683
        %v1685 = vsel %vm1609, %v1576, -inf
        %1686 = vmax.xlane.f32.xlu0 %v1685
        %v1687 = vpop.xlane.xlu0 %1686
        %v1688 = vsel %vm1609, %v1581, -inf
        %1689 = vmax.xlane.f32.xlu0 %v1688
        %v1690 = vpop.xlane.xlu0 %1689
        %v1691 = vsel %vm1609, %v1586, -inf
        %1692 = vmax.xlane.f32.xlu0 %v1691
        %v1693 = vpop.xlane.xlu0 %1692
        %v1694 = vsel %vm1609, %v1591, -inf
        %1695 = vmax.xlane.f32.xlu0 %v1694
        %v1696 = vpop.xlane.xlu0 %1695
        %v1697 = vsel %vm1609, %v1596, -inf
        %1698 = vmax.xlane.f32.xlu0 %v1697
        %v1699 = vpop.xlane.xlu0 %1698
        %v1700 = vsel %vm1609, %v1601, -inf
        %1701 = vmax.xlane.f32.xlu0 %v1700
        %v1702 = vpop.xlane.xlu0 %1701
        %v1703 = vsel %vm1609, %v1606, -inf
        %1704 = vmax.xlane.f32.xlu0 %v1703
        %v1705 = vpop.xlane.xlu0 %1704
        %v1706 = vsub.f32 %v1451, %v1612
        %v1707 = vsub.f32 %v1456, %v1615
        %v1708 = vsub.f32 %v1461, %v1618
        %v1709 = vsub.f32 %v1466, %v1621
        %v1710 = vsub.f32 %v1471, %v1624
        %v1711 = vsub.f32 %v1476, %v1627
        %v1712 = vsub.f32 %v1481, %v1630
        %v1713 = vsub.f32 %v1486, %v1633
        %v1714 = vsub.f32 %v1491, %v1636
        %v1715 = vsub.f32 %v1496, %v1639
        %v1716 = vsub.f32 %v1501, %v1642
        %v1717 = vsub.f32 %v1506, %v1645
        %v1718 = vsub.f32 %v1511, %v1648
        %v1719 = vsub.f32 %v1516, %v1651
        %v1720 = vsub.f32 %v1521, %v1654
        %v1721 = vsub.f32 %v1526, %v1657
        %v1722 = vsub.f32 %v1531, %v1660
        %v1723 = vsub.f32 %v1536, %v1663
        %v1724 = vsub.f32 %v1541, %v1666
        %v1725 = vsub.f32 %v1546, %v1669
        %v1726 = vsub.f32 %v1551, %v1672
        %v1727 = vsub.f32 %v1556, %v1675
        %v1728 = vsub.f32 %v1561, %v1678
        %v1729 = vsub.f32 %v1566, %v1681
        %v1730 = vsub.f32 %v1571, %v1684
        %v1731 = vsub.f32 %v1576, %v1687
        %v1732 = vsub.f32 %v1581, %v1690
        %v1733 = vsub.f32 %v1586, %v1693
        %v1734 = vsub.f32 %v1591, %v1696
        %v1735 = vsub.f32 %v1596, %v1699
        %v1736 = vsub.f32 %v1601, %v1702
        %v1737 = vsub.f32 %v1606, %v1705
        %v1738 = vmul.f32 %v1706, 1.442695
        %v1739 = vpow.pop %v1738
        %v1740 = vmul.f32 %v1707, 1.442695
        %v1741 = vpow.pop %v1740
        %v1742 = vmul.f32 %v1708, 1.442695
        %v1743 = vpow.pop %v1742
        %v1744 = vmul.f32 %v1709, 1.442695
        %v1745 = vpow.pop %v1744
        %v1746 = vmul.f32 %v1710, 1.442695
        %v1747 = vpow.pop %v1746
        %v1748 = vmul.f32 %v1711, 1.442695
        %v1749 = vpow.pop %v1748
        %v1750 = vmul.f32 %v1712, 1.442695
        %v1751 = vpow.pop %v1750
        %v1752 = vmul.f32 %v1713, 1.442695
        %v1753 = vpow.pop %v1752
        %v1754 = vmul.f32 %v1714, 1.442695
        %v1755 = vpow.pop %v1754
        %v1756 = vmul.f32 %v1715, 1.442695
        %v1757 = vpow.pop %v1756
        %v1758 = vmul.f32 %v1716, 1.442695
        %v1759 = vpow.pop %v1758
        %v1760 = vmul.f32 %v1717, 1.442695
        %v1761 = vpow.pop %v1760
        %v1762 = vmul.f32 %v1718, 1.442695
        %v1763 = vpow.pop %v1762
        %v1764 = vmul.f32 %v1719, 1.442695
        %v1765 = vpow.pop %v1764
        %v1766 = vmul.f32 %v1720, 1.442695
        %v1767 = vpow.pop %v1766
        %v1768 = vmul.f32 %v1721, 1.442695
        %v1769 = vpow.pop %v1768
        %v1770 = vmul.f32 %v1722, 1.442695
        %v1771 = vpow.pop %v1770
        %v1772 = vmul.f32 %v1723, 1.442695
        %v1773 = vpow.pop %v1772
        %v1774 = vmul.f32 %v1724, 1.442695
        %v1775 = vpow.pop %v1774
        %v1776 = vmul.f32 %v1725, 1.442695
        %v1777 = vpow.pop %v1776
        %v1778 = vmul.f32 %v1726, 1.442695
        %v1779 = vpow.pop %v1778
        %v1780 = vmul.f32 %v1727, 1.442695
        %v1781 = vpow.pop %v1780
        %v1782 = vmul.f32 %v1728, 1.442695
        %v1783 = vpow.pop %v1782
        %v1784 = vmul.f32 %v1729, 1.442695
        %v1785 = vpow.pop %v1784
        %v1786 = vmul.f32 %v1730, 1.442695
        %v1787 = vpow.pop %v1786
        %v1788 = vmul.f32 %v1731, 1.442695
        %v1789 = vpow.pop %v1788
        %v1790 = vmul.f32 %v1732, 1.442695
        %v1791 = vpow.pop %v1790
        %v1792 = vmul.f32 %v1733, 1.442695
        %v1793 = vpow.pop %v1792
        %v1794 = vmul.f32 %v1734, 1.442695
        %v1795 = vpow.pop %v1794
        %v1796 = vmul.f32 %v1735, 1.442695
        %v1797 = vpow.pop %v1796
        %v1798 = vmul.f32 %v1736, 1.442695
        %v1799 = vpow.pop %v1798
        %v1800 = vmul.f32 %v1737, 1.442695
        %v1801 = vpow.pop %v1800
        %v1802 = vsel %vm1609, %v1739, 0.0
        %1803 = vadd.xlane.f32.xlu0 %v1802
        %v1804 = vpop.xlane.xlu0 %1803
        %v1805 = vsel %vm1609, %v1741, 0.0
        %1806 = vadd.xlane.f32.xlu0 %v1805
        %v1807 = vpop.xlane.xlu0 %1806
        %v1808 = vsel %vm1609, %v1743, 0.0
        %1809 = vadd.xlane.f32.xlu0 %v1808
        %v1810 = vpop.xlane.xlu0 %1809
        %v1811 = vsel %vm1609, %v1745, 0.0
        %1812 = vadd.xlane.f32.xlu0 %v1811
        %v1813 = vpop.xlane.xlu0 %1812
        %v1814 = vsel %vm1609, %v1747, 0.0
        %1815 = vadd.xlane.f32.xlu0 %v1814
        %v1816 = vpop.xlane.xlu0 %1815
        %v1817 = vsel %vm1609, %v1749, 0.0
        %1818 = vadd.xlane.f32.xlu0 %v1817
        %v1819 = vpop.xlane.xlu0 %1818
        %v1820 = vsel %vm1609, %v1751, 0.0
        %1821 = vadd.xlane.f32.xlu0 %v1820
        %v1822 = vpop.xlane.xlu0 %1821
        %v1823 = vsel %vm1609, %v1753, 0.0
        %1824 = vadd.xlane.f32.xlu0 %v1823
        %v1825 = vpop.xlane.xlu0 %1824
        %v1826 = vsel %vm1609, %v1755, 0.0
        %1827 = vadd.xlane.f32.xlu0 %v1826
        %v1828 = vpop.xlane.xlu0 %1827
        %v1829 = vsel %vm1609, %v1757, 0.0
        %1830 = vadd.xlane.f32.xlu0 %v1829
        %v1831 = vpop.xlane.xlu0 %1830
        %v1832 = vsel %vm1609, %v1759, 0.0
        %1833 = vadd.xlane.f32.xlu0 %v1832
        %v1834 = vpop.xlane.xlu0 %1833
        %v1835 = vsel %vm1609, %v1761, 0.0
        %1836 = vadd.xlane.f32.xlu0 %v1835
        %v1837 = vpop.xlane.xlu0 %1836
        %v1838 = vsel %vm1609, %v1763, 0.0
        %1839 = vadd.xlane.f32.xlu0 %v1838
        %v1840 = vpop.xlane.xlu0 %1839
        %v1841 = vsel %vm1609, %v1765, 0.0
        %1842 = vadd.xlane.f32.xlu0 %v1841
        %v1843 = vpop.xlane.xlu0 %1842
        %v1844 = vsel %vm1609, %v1767, 0.0
        %1845 = vadd.xlane.f32.xlu0 %v1844
        %v1846 = vpop.xlane.xlu0 %1845
        %v1847 = vsel %vm1609, %v1769, 0.0
        %1848 = vadd.xlane.f32.xlu0 %v1847
        %v1849 = vpop.xlane.xlu0 %1848
        %v1850 = vsel %vm1609, %v1771, 0.0
        %1851 = vadd.xlane.f32.xlu0 %v1850
        %v1852 = vpop.xlane.xlu0 %1851
        %v1853 = vsel %vm1609, %v1773, 0.0
        %1854 = vadd.xlane.f32.xlu0 %v1853
        %v1855 = vpop.xlane.xlu0 %1854
        %v1856 = vsel %vm1609, %v1775, 0.0
        %1857 = vadd.xlane.f32.xlu0 %v1856
        %v1858 = vpop.xlane.xlu0 %1857
        %v1859 = vsel %vm1609, %v1777, 0.0
        %1860 = vadd.xlane.f32.xlu0 %v1859
        %v1861 = vpop.xlane.xlu0 %1860
        %v1862 = vsel %vm1609, %v1779, 0.0
        %1863 = vadd.xlane.f32.xlu0 %v1862
        %v1864 = vpop.xlane.xlu0 %1863
        %v1865 = vsel %vm1609, %v1781, 0.0
        %1866 = vadd.xlane.f32.xlu0 %v1865
        %v1867 = vpop.xlane.xlu0 %1866
        %v1868 = vsel %vm1609, %v1783, 0.0
        %1869 = vadd.xlane.f32.xlu0 %v1868
        %v1870 = vpop.xlane.xlu0 %1869
        %v1871 = vsel %vm1609, %v1785, 0.0
        %1872 = vadd.xlane.f32.xlu0 %v1871
        %v1873 = vpop.xlane.xlu0 %1872
        %v1874 = vsel %vm1609, %v1787, 0.0
        %1875 = vadd.xlane.f32.xlu0 %v1874
        %v1876 = vpop.xlane.xlu0 %1875
        %v1877 = vsel %vm1609, %v1789, 0.0
        %1878 = vadd.xlane.f32.xlu0 %v1877
        %v1879 = vpop.xlane.xlu0 %1878
        %v1880 = vsel %vm1609, %v1791, 0.0
        %1881 = vadd.xlane.f32.xlu0 %v1880
        %v1882 = vpop.xlane.xlu0 %1881
        %v1883 = vsel %vm1609, %v1793, 0.0
        %1884 = vadd.xlane.f32.xlu0 %v1883
        %v1885 = vpop.xlane.xlu0 %1884
        %v1886 = vsel %vm1609, %v1795, 0.0
        %1887 = vadd.xlane.f32.xlu0 %v1886
        %v1888 = vpop.xlane.xlu0 %1887
        %v1889 = vsel %vm1609, %v1797, 0.0
        %1890 = vadd.xlane.f32.xlu0 %v1889
        %v1891 = vpop.xlane.xlu0 %1890
        %v1892 = vsel %vm1609, %v1799, 0.0
        %1893 = vadd.xlane.f32.xlu0 %v1892
        %v1894 = vpop.xlane.xlu0 %1893
        %v1895 = vsel %vm1609, %v1801, 0.0
        %1896 = vadd.xlane.f32.xlu0 %v1895
        %v1897 = vpop.xlane.xlu0 %1896
        %v1898 = vrcp.pop %v1804
        %v1899 = vmul.f32 %v1739, %v1898
        %v1900 = vrcp.pop %v1807
        %v1901 = vmul.f32 %v1741, %v1900
        %v1902 = vrcp.pop %v1810
        %v1903 = vmul.f32 %v1743, %v1902
        %v1904 = vrcp.pop %v1813
        %v1905 = vmul.f32 %v1745, %v1904
        %v1906 = vrcp.pop %v1816
        %v1907 = vmul.f32 %v1747, %v1906
        %v1908 = vrcp.pop %v1819
        %v1909 = vmul.f32 %v1749, %v1908
        %v1910 = vrcp.pop %v1822
        %v1911 = vmul.f32 %v1751, %v1910
        %v1912 = vrcp.pop %v1825
        %v1913 = vmul.f32 %v1753, %v1912
        %v1914 = vrcp.pop %v1828
        %v1915 = vmul.f32 %v1755, %v1914
        %v1916 = vrcp.pop %v1831
        %v1917 = vmul.f32 %v1757, %v1916
        %v1918 = vrcp.pop %v1834
        %v1919 = vmul.f32 %v1759, %v1918
        %v1920 = vrcp.pop %v1837
        %v1921 = vmul.f32 %v1761, %v1920
        %v1922 = vrcp.pop %v1840
        %v1923 = vmul.f32 %v1763, %v1922
        %v1924 = vrcp.pop %v1843
        %v1925 = vmul.f32 %v1765, %v1924
        %v1926 = vrcp.pop %v1846
        %v1927 = vmul.f32 %v1767, %v1926
        %v1928 = vrcp.pop %v1849
        %v1929 = vmul.f32 %v1769, %v1928
        %v1930 = vrcp.pop %v1852
        %v1931 = vmul.f32 %v1771, %v1930
        %v1932 = vrcp.pop %v1855
        %v1933 = vmul.f32 %v1773, %v1932
        %v1934 = vrcp.pop %v1858
        %v1935 = vmul.f32 %v1775, %v1934
        %v1936 = vrcp.pop %v1861
        %v1937 = vmul.f32 %v1777, %v1936
        %v1938 = vrcp.pop %v1864
        %v1939 = vmul.f32 %v1779, %v1938
        %v1940 = vrcp.pop %v1867
        %v1941 = vmul.f32 %v1781, %v1940
        %v1942 = vrcp.pop %v1870
        %v1943 = vmul.f32 %v1783, %v1942
        %v1944 = vrcp.pop %v1873
        %v1945 = vmul.f32 %v1785, %v1944
        %v1946 = vrcp.pop %v1876
        %v1947 = vmul.f32 %v1787, %v1946
        %v1948 = vrcp.pop %v1879
        %v1949 = vmul.f32 %v1789, %v1948
        %v1950 = vrcp.pop %v1882
        %v1951 = vmul.f32 %v1791, %v1950
        %v1952 = vrcp.pop %v1885
        %v1953 = vmul.f32 %v1793, %v1952
        %v1954 = vrcp.pop %v1888
        %v1955 = vmul.f32 %v1795, %v1954
        %v1956 = vrcp.pop %v1891
        %v1957 = vmul.f32 %v1797, %v1956
        %v1958 = vrcp.pop %v1894
        %v1959 = vmul.f32 %v1799, %v1958
        %v1960 = vrcp.pop %v1897
        %v1961 = vmul.f32 %v1801, %v1960
        %1962 = vrot.lane.b32.xlu0 %v1287, 124
        %v1963 = vpop.permute.xlu0 %1962
        %1964 = vrot.lane.b32.xlu0 %v1288, 124
        %v1965 = vpop.permute.xlu0 %1964
        %1966 = vrot.lane.b32.xlu0 %v1289, 124
        %v1967 = vpop.permute.xlu0 %1966
        %1968 = vrot.lane.b32.xlu0 %v1290, 124
        %v1969 = vpop.permute.xlu0 %1968
        %1970 = vrot.lane.b32.xlu0 %v1291, 124
        %v1971 = vpop.permute.xlu0 %1970
        %1972 = vrot.lane.b32.xlu0 %v1292, 124
        %v1973 = vpop.permute.xlu0 %1972
        %1974 = vrot.lane.b32.xlu0 %v1293, 124
        %v1975 = vpop.permute.xlu0 %1974
        %1976 = vrot.lane.b32.xlu0 %v1294, 124
        %v1977 = vpop.permute.xlu0 %1976
        %v1987 = vsel %vm1609, %v1899, 0
        %v1990 = vsel %vm1609, %v1901, 0
        %v1993 = vsel %vm1609, %v1903, 0
        %v1996 = vsel %vm1609, %v1905, 0
        %v1999 = vsel %vm1609, %v1907, 0
        %v2002 = vsel %vm1609, %v1909, 0
        %v2005 = vsel %vm1609, %v1911, 0
        %v2008 = vsel %vm1609, %v1913, 0
        %v2011 = vsel %vm1609, %v1915, 0
        %v2014 = vsel %vm1609, %v1917, 0
        %v2017 = vsel %vm1609, %v1919, 0
        %v2020 = vsel %vm1609, %v1921, 0
        %v2023 = vsel %vm1609, %v1923, 0
        %v2026 = vsel %vm1609, %v1925, 0
        %v2029 = vsel %vm1609, %v1927, 0
        %v2032 = vsel %vm1609, %v1929, 0
        %v2035 = vsel %vm1609, %v1931, 0
        %v2038 = vsel %vm1609, %v1933, 0
        %v2041 = vsel %vm1609, %v1935, 0
        %v2044 = vsel %vm1609, %v1937, 0
        %v2047 = vsel %vm1609, %v1939, 0
        %v2050 = vsel %vm1609, %v1941, 0
        %v2053 = vsel %vm1609, %v1943, 0
        %v2056 = vsel %vm1609, %v1945, 0
        %v2059 = vsel %vm1609, %v1947, 0
        %v2062 = vsel %vm1609, %v1949, 0
        %v2065 = vsel %vm1609, %v1951, 0
        %v2068 = vsel %vm1609, %v1953, 0
        %v2071 = vsel %vm1609, %v1955, 0
        %v2074 = vsel %vm1609, %v1957, 0
        %v2077 = vsel %vm1609, %v1959, 0
        %v2080 = vsel %vm1609, %v1961, 0
        %2082 = vmatprep.subr.mxu0 0.0
        %2083 = vmatpush1.msra.mxu0 %v1963
        %2084 = vmatprep.subr.mxu0 0.0
        %2085 = vmatpush1.msra.mxu0 %v1965
        %2086 = vmatprep.subr.mxu0 0.0
        %2087 = vmatpush1.msra.mxu0 %v1967
        %2088 = vmatprep.subr.mxu0 0.0
        %2089 = vmatpush1.msra.mxu0 %v1969
        %2090 = vmatprep.subr.mxu0 0.0
        %2091 = vmatpush1.msra.mxu0 %v1971
        %2092 = vmatprep.subr.mxu0 0.0
        %2093 = vmatpush1.msra.mxu0 %v1973
        %2094 = vmatprep.subr.mxu0 0.0
        %2095 = vmatpush1.msra.mxu0 %v1975
        %2096 = vmatprep.subr.mxu0 0.0
        %2097 = vmatpush1.msra.mxu0 %v1977
        %2098 = vmatprep.subr.mxu0 0.0
        %2099 = vmatpush1.msra.mxu0 0.0
        %2100 = vmatprep.subr.mxu0 0.0
        %2101 = vmatpush1.msra.mxu0 0.0
        %2102 = vmatprep.subr.mxu0 0.0
        %2103 = vmatpush1.msra.mxu0 0.0
        %2104 = vmatprep.subr.mxu0 0.0
        %2105 = vmatpush1.msra.mxu0 0.0
        %2106 = vmatprep.subr.mxu0 0.0
        %2107 = vmatpush1.msra.mxu0 0.0
        %2108 = vmatprep.subr.mxu0 0.0
        %2109 = vmatpush1.msra.mxu0 0.0
        %2110 = vmatprep.subr.mxu0 0.0
        %2111 = vmatpush1.msra.mxu0 0.0
        %2112 = vmatprep.subr.mxu0 0.0
        %2113 = vmatpush1.msra.mxu0 0.0
        %2114 = vmatprep.subr.mxu0 0.0
        %2115 = vmatpush1.msra.mxu0 0.0
        %2116 = vmatprep.subr.mxu0 0.0
        %2117 = vmatpush1.msra.mxu0 0.0
        %2118 = vmatprep.subr.mxu0 0.0
        %2119 = vmatpush1.msra.mxu0 0.0
        %2120 = vmatprep.subr.mxu0 0.0
        %2121 = vmatpush1.msra.mxu0 0.0
        %2122 = vmatprep.subr.mxu0 0.0
        %2123 = vmatpush1.msra.mxu0 0.0
        %2124 = vmatprep.subr.mxu0 0.0
        %2125 = vmatpush1.msra.mxu0 0.0
        %2126 = vmatprep.subr.mxu0 0.0
        %2127 = vmatpush1.msra.mxu0 0.0
        %2128 = vmatprep.subr.mxu0 0.0
        %2129 = vmatpush1.msra.mxu0 0.0
        %2130 = vmatprep.subr.mxu0 0.0
        %2131 = vmatpush1.msra.mxu0 0.0
        %2132 = vmatprep.subr.mxu0 0.0
        %2133 = vmatpush1.msra.mxu0 0.0
        %2134 = vmatprep.subr.mxu0 0.0
        %2135 = vmatpush1.msra.mxu0 0.0
        %2136 = vmatprep.subr.mxu0 0.0
        %2137 = vmatpush1.msra.mxu0 0.0
        %2138 = vmatprep.subr.mxu0 0.0
        %2139 = vmatpush1.msra.mxu0 0.0
        %2140 = vmatprep.subr.mxu0 0.0
        %2141 = vmatpush1.msra.mxu0 0.0
        %2142 = vmatprep.subr.mxu0 0.0
        %2143 = vmatpush1.msra.mxu0 0.0
        %2144 = vmatprep.subr.mxu0 0.0
        %2145 = vmatpush1.msra.mxu0 0.0
        %2146 = vmatprep.mubr.f32.mxu0 0.0
        %2147 = vmatmul.mubr.f32.gmra.mrb[0].mxu0 %v1987
        %v2148 = vpop.f32.mrb[0].mxu0
        %v2149 = vadd.f32 0.0, %v2148
        %v2150 = vpop.f32.mrb[0].mxu0
        %2151 = vmatprep.mubr.f32.mxu0 0.0
        %2152 = vmatmul.mubr.f32.gmra.mrb[0].mxu0 %v1990
        %v2153 = vpop.f32.mrb[0].mxu0
        %v2154 = vadd.f32 0.0, %v2153
        %v2155 = vpop.f32.mrb[0].mxu0
        %2156 = vmatprep.mubr.f32.mxu0 0.0
        %2157 = vmatmul.mubr.f32.gmra.mrb[0].mxu0 %v1993
        %v2158 = vpop.f32.mrb[0].mxu0
        %v2159 = vadd.f32 0.0, %v2158
        %v2160 = vpop.f32.mrb[0].mxu0
        %2161 = vmatprep.mubr.f32.mxu0 0.0
        %2162 = vmatmul.mubr.f32.gmra.mrb[0].mxu0 %v1996
        %v2163 = vpop.f32.mrb[0].mxu0
        %v2164 = vadd.f32 0.0, %v2163
        %v2165 = vpop.f32.mrb[0].mxu0
        %2166 = vmatprep.mubr.f32.mxu0 0.0
        %2167 = vmatmul.mubr.f32.gmra.mrb[0].mxu0 %v1999
        %v2168 = vpop.f32.mrb[0].mxu0
        %v2169 = vadd.f32 0.0, %v2168
        %v2170 = vpop.f32.mrb[0].mxu0
        %2171 = vmatprep.mubr.f32.mxu0 0.0
        %2172 = vmatmul.mubr.f32.gmra.mrb[0].mxu0 %v2002
        %v2173 = vpop.f32.mrb[0].mxu0
        %v2174 = vadd.f32 0.0, %v2173
        %v2175 = vpop.f32.mrb[0].mxu0
        %2176 = vmatprep.mubr.f32.mxu0 0.0
        %2177 = vmatmul.mubr.f32.gmra.mrb[0].mxu0 %v2005
        %v2178 = vpop.f32.mrb[0].mxu0
        %v2179 = vadd.f32 0.0, %v2178
        %v2180 = vpop.f32.mrb[0].mxu0
        %2181 = vmatprep.mubr.f32.mxu0 0.0
        %2182 = vmatmul.mubr.f32.gmra.mrb[0].mxu0 %v2008
        %v2183 = vpop.f32.mrb[0].mxu0
        %v2184 = vadd.f32 0.0, %v2183
        %v2185 = vpop.f32.mrb[0].mxu0
        %2186 = vmatprep.mubr.f32.mxu0 0.0
        %2187 = vmatmul.mubr.f32.gmra.mrb[0].mxu0 %v2011
        %v2188 = vpop.f32.mrb[0].mxu0
        %v2189 = vadd.f32 0.0, %v2188
        %v2190 = vpop.f32.mrb[0].mxu0
        %2191 = vmatprep.mubr.f32.mxu0 0.0
        %2192 = vmatmul.mubr.f32.gmra.mrb[0].mxu0 %v2014
        %v2193 = vpop.f32.mrb[0].mxu0
        %v2194 = vadd.f32 0.0, %v2193
        %v2195 = vpop.f32.mrb[0].mxu0
        %2196 = vmatprep.mubr.f32.mxu0 0.0
        %2197 = vmatmul.mubr.f32.gmra.mrb[0].mxu0 %v2017
        %v2198 = vpop.f32.mrb[0].mxu0
        %v2199 = vadd.f32 0.0, %v2198
        %v2200 = vpop.f32.mrb[0].mxu0
        %2201 = vmatprep.mubr.f32.mxu0 0.0
        %2202 = vmatmul.mubr.f32.gmra.mrb[0].mxu0 %v2020
        %v2203 = vpop.f32.mrb[0].mxu0
        %v2204 = vadd.f32 0.0, %v2203
        %v2205 = vpop.f32.mrb[0].mxu0
        %2206 = vmatprep.mubr.f32.mxu0 0.0
        %2207 = vmatmul.mubr.f32.gmra.mrb[0].mxu0 %v2023
        %v2208 = vpop.f32.mrb[0].mxu0
        %v2209 = vadd.f32 0.0, %v2208
        %v2210 = vpop.f32.mrb[0].mxu0
        %2211 = vmatprep.mubr.f32.mxu0 0.0
        %2212 = vmatmul.mubr.f32.gmra.mrb[0].mxu0 %v2026
        %v2213 = vpop.f32.mrb[0].mxu0
        %v2214 = vadd.f32 0.0, %v2213
        %v2215 = vpop.f32.mrb[0].mxu0
        %2216 = vmatprep.mubr.f32.mxu0 0.0
        %2217 = vmatmul.mubr.f32.gmra.mrb[0].mxu0 %v2029
        %v2218 = vpop.f32.mrb[0].mxu0
        %v2219 = vadd.f32 0.0, %v2218
        %v2220 = vpop.f32.mrb[0].mxu0
        %2221 = vmatprep.mubr.f32.mxu0 0.0
        %2222 = vmatmul.mubr.f32.gmra.mrb[0].mxu0 %v2032
        %v2223 = vpop.f32.mrb[0].mxu0
        %v2224 = vadd.f32 0.0, %v2223
        %v2225 = vpop.f32.mrb[0].mxu0
        %2226 = vmatprep.mubr.f32.mxu0 0.0
        %2227 = vmatmul.mubr.f32.gmra.mrb[0].mxu0 %v2035
        %v2228 = vpop.f32.mrb[0].mxu0
        %v2229 = vadd.f32 0.0, %v2228
        %v2230 = vpop.f32.mrb[0].mxu0
        %2231 = vmatprep.mubr.f32.mxu0 0.0
        %2232 = vmatmul.mubr.f32.gmra.mrb[0].mxu0 %v2038
        %v2233 = vpop.f32.mrb[0].mxu0
        %v2234 = vadd.f32 0.0, %v2233
        %v2235 = vpop.f32.mrb[0].mxu0
        %2236 = vmatprep.mubr.f32.mxu0 0.0
        %2237 = vmatmul.mubr.f32.gmra.mrb[0].mxu0 %v2041
        %v2238 = vpop.f32.mrb[0].mxu0
        %v2239 = vadd.f32 0.0, %v2238
        %v2240 = vpop.f32.mrb[0].mxu0
        %2241 = vmatprep.mubr.f32.mxu0 0.0
        %2242 = vmatmul.mubr.f32.gmra.mrb[0].mxu0 %v2044
        %v2243 = vpop.f32.mrb[0].mxu0
        %v2244 = vadd.f32 0.0, %v2243
        %v2245 = vpop.f32.mrb[0].mxu0
        %2246 = vmatprep.mubr.f32.mxu0 0.0
        %2247 = vmatmul.mubr.f32.gmra.mrb[0].mxu0 %v2047
        %v2248 = vpop.f32.mrb[0].mxu0
        %v2249 = vadd.f32 0.0, %v2248
        %v2250 = vpop.f32.mrb[0].mxu0
        %2251 = vmatprep.mubr.f32.mxu0 0.0
        %2252 = vmatmul.mubr.f32.gmra.mrb[0].mxu0 %v2050
        %v2253 = vpop.f32.mrb[0].mxu0
        %v2254 = vadd.f32 0.0, %v2253
        %v2255 = vpop.f32.mrb[0].mxu0
        %2256 = vmatprep.mubr.f32.mxu0 0.0
        %2257 = vmatmul.mubr.f32.gmra.mrb[0].mxu0 %v2053
        %v2258 = vpop.f32.mrb[0].mxu0
        %v2259 = vadd.f32 0.0, %v2258
        %v2260 = vpop.f32.mrb[0].mxu0
        %2261 = vmatprep.mubr.f32.mxu0 0.0
        %2262 = vmatmul.mubr.f32.gmra.mrb[0].mxu0 %v2056
        %v2263 = vpop.f32.mrb[0].mxu0
        %v2264 = vadd.f32 0.0, %v2263
        %v2265 = vpop.f32.mrb[0].mxu0
        %2266 = vmatprep.mubr.f32.mxu0 0.0
        %2267 = vmatmul.mubr.f32.gmra.mrb[0].mxu0 %v2059
        %v2268 = vpop.f32.mrb[0].mxu0
        %v2269 = vadd.f32 0.0, %v2268
        %v2270 = vpop.f32.mrb[0].mxu0
        %2271 = vmatprep.mubr.f32.mxu0 0.0
        %2272 = vmatmul.mubr.f32.gmra.mrb[0].mxu0 %v2062
        %v2273 = vpop.f32.mrb[0].mxu0
        %v2274 = vadd.f32 0.0, %v2273
        %v2275 = vpop.f32.mrb[0].mxu0
        %2276 = vmatprep.mubr.f32.mxu0 0.0
        %2277 = vmatmul.mubr.f32.gmra.mrb[0].mxu0 %v2065
        %v2278 = vpop.f32.mrb[0].mxu0
        %v2279 = vadd.f32 0.0, %v2278
        %v2280 = vpop.f32.mrb[0].mxu0
        %2281 = vmatprep.mubr.f32.mxu0 0.0
        %2282 = vmatmul.mubr.f32.gmra.mrb[0].mxu0 %v2068
        %v2283 = vpop.f32.mrb[0].mxu0
        %v2284 = vadd.f32 0.0, %v2283
        %v2285 = vpop.f32.mrb[0].mxu0
        %2286 = vmatprep.mubr.f32.mxu0 0.0
        %2287 = vmatmul.mubr.f32.gmra.mrb[0].mxu0 %v2071
        %v2288 = vpop.f32.mrb[0].mxu0
        %v2289 = vadd.f32 0.0, %v2288
        %v2290 = vpop.f32.mrb[0].mxu0
        %2291 = vmatprep.mubr.f32.mxu0 0.0
        %2292 = vmatmul.mubr.f32.gmra.mrb[0].mxu0 %v2074
        %v2293 = vpop.f32.mrb[0].mxu0
        %v2294 = vadd.f32 0.0, %v2293
        %v2295 = vpop.f32.mrb[0].mxu0
        %2296 = vmatprep.mubr.f32.mxu0 0.0
        %2297 = vmatmul.mubr.f32.gmra.mrb[0].mxu0 %v2077
        %v2298 = vpop.f32.mrb[0].mxu0
        %v2299 = vadd.f32 0.0, %v2298
        %v2300 = vpop.f32.mrb[0].mxu0
        %2301 = vmatprep.mubr.f32.mxu0 0.0
        %2302 = vmatmul.mubr.f32.gmra.mrb[0].mxu0 %v2080
        %v2303 = vpop.f32.mrb[0].mxu0
        %v2304 = vadd.f32 0.0, %v2303
        %v2305 = vpop.f32.mrb[0].mxu0
        %2306 = vdwg.mxu0
        %v2307 = vld [vmem:[%s7] sm:$0xff]
        %v2309 = vsel %vm1295, %v2307, 0
        %v2312 = vsel %vm1295, %v2149, 0
        %v2315 = vsel %vm1295, %v2154, 0
        %v2318 = vsel %vm1295, %v2159, 0
        %v2321 = vsel %vm1295, %v2164, 0
        %v2324 = vsel %vm1295, %v2169, 0
        %v2327 = vsel %vm1295, %v2174, 0
        %v2330 = vsel %vm1295, %v2179, 0
        %v2333 = vsel %vm1295, %v2184, 0
        %v2336 = vsel %vm1295, %v2189, 0
        %v2339 = vsel %vm1295, %v2194, 0
        %v2342 = vsel %vm1295, %v2199, 0
        %v2345 = vsel %vm1295, %v2204, 0
        %v2348 = vsel %vm1295, %v2209, 0
        %v2351 = vsel %vm1295, %v2214, 0
        %v2354 = vsel %vm1295, %v2219, 0
        %v2357 = vsel %vm1295, %v2224, 0
        %v2360 = vsel %vm1295, %v2229, 0
        %v2363 = vsel %vm1295, %v2234, 0
        %v2366 = vsel %vm1295, %v2239, 0
        %v2369 = vsel %vm1295, %v2244, 0
        %v2372 = vsel %vm1295, %v2249, 0
        %v2375 = vsel %vm1295, %v2254, 0
        %v2378 = vsel %vm1295, %v2259, 0
        %v2381 = vsel %vm1295, %v2264, 0
        %v2384 = vsel %vm1295, %v2269, 0
        %v2387 = vsel %vm1295, %v2274, 0
        %v2390 = vsel %vm1295, %v2279, 0
        %v2393 = vsel %vm1295, %v2284, 0
        %v2396 = vsel %vm1295, %v2289, 0
        %v2399 = vsel %vm1295, %v2294, 0
        %v2402 = vsel %vm1295, %v2299, 0
        %v2405 = vsel %vm1295, %v2304, 0
        %2407 = vmatprep.subr.mxu0 0.0
        %2408 = vmatpush1.xpose.msra.mxu0 %v2312
        %2409 = vmatprep.subr.mxu0 0.0
        %2410 = vmatpush1.xpose.msra.mxu0 %v2315
        %2411 = vmatprep.subr.mxu0 0.0
        %2412 = vmatpush1.xpose.msra.mxu0 %v2318
        %2413 = vmatprep.subr.mxu0 0.0
        %2414 = vmatpush1.xpose.msra.mxu0 %v2321
        %2415 = vmatprep.subr.mxu0 0.0
        %2416 = vmatpush1.xpose.msra.mxu0 %v2324
        %2417 = vmatprep.subr.mxu0 0.0
        %2418 = vmatpush1.xpose.msra.mxu0 %v2327
        %2419 = vmatprep.subr.mxu0 0.0
        %2420 = vmatpush1.xpose.msra.mxu0 %v2330
        %2421 = vmatprep.subr.mxu0 0.0
        %2422 = vmatpush1.xpose.msra.mxu0 %v2333
        %2423 = vmatprep.subr.mxu0 0.0
        %2424 = vmatpush1.xpose.msra.mxu0 %v2336
        %2425 = vmatprep.subr.mxu0 0.0
        %2426 = vmatpush1.xpose.msra.mxu0 %v2339
        %2427 = vmatprep.subr.mxu0 0.0
        %2428 = vmatpush1.xpose.msra.mxu0 %v2342
        %2429 = vmatprep.subr.mxu0 0.0
        %2430 = vmatpush1.xpose.msra.mxu0 %v2345
        %2431 = vmatprep.subr.mxu0 0.0
        %2432 = vmatpush1.xpose.msra.mxu0 %v2348
        %2433 = vmatprep.subr.mxu0 0.0
        %2434 = vmatpush1.xpose.msra.mxu0 %v2351
        %2435 = vmatprep.subr.mxu0 0.0
        %2436 = vmatpush1.xpose.msra.mxu0 %v2354
        %2437 = vmatprep.subr.mxu0 0.0
        %2438 = vmatpush1.xpose.msra.mxu0 %v2357
        %2439 = vmatprep.subr.mxu0 0.0
        %2440 = vmatpush1.xpose.msra.mxu0 %v2360
        %2441 = vmatprep.subr.mxu0 0.0
        %2442 = vmatpush1.xpose.msra.mxu0 %v2363
        %2443 = vmatprep.subr.mxu0 0.0
        %2444 = vmatpush1.xpose.msra.mxu0 %v2366
        %2445 = vmatprep.subr.mxu0 0.0
        %2446 = vmatpush1.xpose.msra.mxu0 %v2369
        %2447 = vmatprep.subr.mxu0 0.0
        %2448 = vmatpush1.xpose.msra.mxu0 %v2372
        %2449 = vmatprep.subr.mxu0 0.0
        %2450 = vmatpush1.xpose.msra.mxu0 %v2375
        %2451 = vmatprep.subr.mxu0 0.0
        %2452 = vmatpush1.xpose.msra.mxu0 %v2378
        %2453 = vmatprep.subr.mxu0 0.0
        %2454 = vmatpush1.xpose.msra.mxu0 %v2381
        %2455 = vmatprep.subr.mxu0 0.0
        %2456 = vmatpush1.xpose.msra.mxu0 %v2384
        %2457 = vmatprep.subr.mxu0 0.0
        %2458 = vmatpush1.xpose.msra.mxu0 %v2387
        %2459 = vmatprep.subr.mxu0 0.0
        %2460 = vmatpush1.xpose.msra.mxu0 %v2390
        %2461 = vmatprep.subr.mxu0 0.0
        %2462 = vmatpush1.xpose.msra.mxu0 %v2393
        %2463 = vmatprep.subr.mxu0 0.0
        %2464 = vmatpush1.xpose.msra.mxu0 %v2396
        %2465 = vmatprep.subr.mxu0 0.0
        %2466 = vmatpush1.xpose.msra.mxu0 %v2399
        %2467 = vmatprep.subr.mxu0 0.0
        %2468 = vmatpush1.xpose.msra.mxu0 %v2402
        %2469 = vmatprep.subr.mxu0 0.0
        %2470 = vmatpush1.xpose.msra.mxu0 %v2405
        %2471 = vmatprep.mubr.f32.mxu0 0.0
        %2472 = vmatmul.mubr.f32.gmra.mrb[0].mxu0 %v2309
        %v2473 = vpop.f32.mrb[0].mxu0
        %v2474 = vadd.f32 0.0, %v2473
        %v2475 = vpop.f32.mrb[0].mxu0
        %v2476 = vadd.f32 0.0, %v2475
        %2477 = vdwg.mxu0
        %v2478 = vld [vmem:[%s8] sm:$0xff]
        %2480 = vset.pattern.permute.xlu0 0
        %2481 = vperm.xlu0 %2480, %v2478
        %v2482 = vpop.permute.xlu0 %2481
        %v2484 = vmul.f32 %v2474, %v2482
        %v2485 = vmul.f32 %v2476, %v2482
        %v2486 = vld [vmem:[%s9] sm:$0xff]
        %2488 = vset.pattern.permute.xlu0 0
        %2489 = vperm.xlu0 %2488, %v2486
        %v2490 = vpop.permute.xlu0 %2489
        %v2492 = vadd.f32 %v2484, %v2490
        %v2493 = vadd.f32 %v2485, %v2490
        %v2494 = vadd.f32 %v2492, %v522
        %v2495 = vadd.f32 %v2493, %v523
        %v2496 = vld [vmem:[%s479] sm:$0xff]
        %v2497 = vld [vmem:[%s479 + $0x8] sm:$0xff]
        %v2498 = vld [vmem:[%s489] sm:$0xff]
        %v2499 = vld [vmem:[%s489 + $0x8] sm:$0xff]
        %v2500 = vld [vmem:[%s489 + $0x10] sm:$0xff]
        %v2501 = vld [vmem:[%s489 + $0x18] sm:$0xff]
        %v2502 = vadd.f32 %v2496, %v2497
        %2503 = vadd.xlane.f32.xlu0 %v2502
        %v2504 = vpop.xlane.xlu0 %2503
        %v2505 = vadd.f32 %v2494, %v2495
        %2506 = vadd.xlane.f32.xlu0 %v2505
        %v2507 = vpop.xlane.xlu0 %2506
        %v2508 = vadd.f32 %v2498, %v2499
        %2509 = vadd.xlane.f32.xlu0 %v2508
        %v2510 = vpop.xlane.xlu0 %2509
        %v2511 = vadd.f32 %v2500, %v2501
        %2512 = vadd.xlane.f32.xlu0 %v2511
        %v2513 = vpop.xlane.xlu0 %2512
        %v2514 = vmul.f32 %v2504, 0.00390625
        %v2515 = vmul.f32 %v2507, 0.00390625
        %v2516 = vmul.f32 %v2510, 0.00390625
        %v2517 = vmul.f32 %v2513, 0.00390625
        %v2518 = vld [vmem:[%s10] sm:$0x3]
        %vm2519 = vcmask 261120
        %v2521 = vsel %vm2519, %v2518, 0
        %2523 = vmatprep.subr.mxu0 0.0
        %2524 = vmatpush1.msra.mxu0 %v2514
        %2525 = vmatprep.subr.mxu0 0.0
        %2526 = vmatpush1.msra.mxu0 %v2515
        %2527 = vmatprep.subr.mxu0 0.0
        %2528 = vmatpush1.msra.mxu0 %v2516
        %2529 = vmatprep.subr.mxu0 0.0
        %2530 = vmatpush1.msra.mxu0 %v2517
        %2531 = vmatprep.subr.mxu0 0.0
        %2532 = vmatpush1.msra.mxu0 0.0
        %2533 = vmatprep.subr.mxu0 0.0
        %2534 = vmatpush1.msra.mxu0 0.0
        %2535 = vmatprep.subr.mxu0 0.0
        %2536 = vmatpush1.msra.mxu0 0.0
        %2537 = vmatprep.subr.mxu0 0.0
        %2538 = vmatpush1.msra.mxu0 0.0
        %2539 = vmatprep.subr.mxu0 0.0
        %2540 = vmatpush1.msra.mxu0 0.0
        %2541 = vmatprep.subr.mxu0 0.0
        %2542 = vmatpush1.msra.mxu0 0.0
        %2543 = vmatprep.subr.mxu0 0.0
        %2544 = vmatpush1.msra.mxu0 0.0
        %2545 = vmatprep.subr.mxu0 0.0
        %2546 = vmatpush1.msra.mxu0 0.0
        %2547 = vmatprep.subr.mxu0 0.0
        %2548 = vmatpush1.msra.mxu0 0.0
        %2549 = vmatprep.subr.mxu0 0.0
        %2550 = vmatpush1.msra.mxu0 0.0
        %2551 = vmatprep.subr.mxu0 0.0
        %2552 = vmatpush1.msra.mxu0 0.0
        %2553 = vmatprep.subr.mxu0 0.0
        %2554 = vmatpush1.msra.mxu0 0.0
        %2555 = vmatprep.subr.mxu0 0.0
        %2556 = vmatpush1.msra.mxu0 0.0
        %2557 = vmatprep.subr.mxu0 0.0
        %2558 = vmatpush1.msra.mxu0 0.0
        %2559 = vmatprep.subr.mxu0 0.0
        %2560 = vmatpush1.msra.mxu0 0.0
        %2561 = vmatprep.subr.mxu0 0.0
        %2562 = vmatpush1.msra.mxu0 0.0
        %2563 = vmatprep.subr.mxu0 0.0
        %2564 = vmatpush1.msra.mxu0 0.0
        %2565 = vmatprep.subr.mxu0 0.0
        %2566 = vmatpush1.msra.mxu0 0.0
        %2567 = vmatprep.subr.mxu0 0.0
        %2568 = vmatpush1.msra.mxu0 0.0
        %2569 = vmatprep.subr.mxu0 0.0
        %2570 = vmatpush1.msra.mxu0 0.0
        %2571 = vmatprep.subr.mxu0 0.0
        %2572 = vmatpush1.msra.mxu0 0.0
        %2573 = vmatprep.subr.mxu0 0.0
        %2574 = vmatpush1.msra.mxu0 0.0
        %2575 = vmatprep.subr.mxu0 0.0
        %2576 = vmatpush1.msra.mxu0 0.0
        %2577 = vmatprep.subr.mxu0 0.0
        %2578 = vmatpush1.msra.mxu0 0.0
        %2579 = vmatprep.subr.mxu0 0.0
        %2580 = vmatpush1.msra.mxu0 0.0
        %2581 = vmatprep.subr.mxu0 0.0
        %2582 = vmatpush1.msra.mxu0 0.0
        %2583 = vmatprep.subr.mxu0 0.0
        %2584 = vmatpush1.msra.mxu0 0.0
        %2585 = vmatprep.subr.mxu0 0.0
        %2586 = vmatpush1.msra.mxu0 0.0
        %2587 = vmatprep.mubr.f32.mxu0 0.0
        %2588 = vmatmul.mubr.f32.gmra.mrb[0].mxu0 %v2521
        %v2589 = vpop.f32.mrb[0].mxu0
        %v2590 = vadd.f32 0.0, %v2589
        %v2591 = vpop.f32.mrb[0].mxu0
        %2592 = vdwg.mxu0
        %v2593 = vmax.f32 %v2590, 0.0
        %v2594 = vld [vmem:[%s11] sm:$0xff]
        %v2595 = vld [vmem:[%s11 + $0x8] sm:$0xff]
        %v2596 = vld [vmem:[%s11 + $0x10] sm:$0xff]
        %v2597 = vld [vmem:[%s11 + $0x18] sm:$0xff]
        %vm2598 = vcmask 15360
        %v2600 = vsel %vm2598, %v2594, 0
        %v2603 = vsel %vm2598, %v2595, 0
        %v2606 = vsel %vm2598, %v2596, 0
        %v2609 = vsel %vm2598, %v2597, 0
        %vm2611 = vcmask 1041408
        %v2613 = vsel %vm2611, %v2593, 0
        %2615 = vmatprep.subr.mxu0 0.0
        %2616 = vmatpush1.msra.mxu0 %v2613
        %2617 = vmatprep.subr.mxu0 0.0
        %2618 = vmatpush1.msra.mxu0 0.0
        %2619 = vmatprep.subr.mxu0 0.0
        %2620 = vmatpush1.msra.mxu0 0.0
        %2621 = vmatprep.subr.mxu0 0.0
        %2622 = vmatpush1.msra.mxu0 0.0
        %2623 = vmatprep.subr.mxu0 0.0
        %2624 = vmatpush1.msra.mxu0 0.0
        %2625 = vmatprep.subr.mxu0 0.0
        %2626 = vmatpush1.msra.mxu0 0.0
        %2627 = vmatprep.subr.mxu0 0.0
        %2628 = vmatpush1.msra.mxu0 0.0
        %2629 = vmatprep.subr.mxu0 0.0
        %2630 = vmatpush1.msra.mxu0 0.0
        %2631 = vmatprep.subr.mxu0 0.0
        %2632 = vmatpush1.msra.mxu0 0.0
        %2633 = vmatprep.subr.mxu0 0.0
        %2634 = vmatpush1.msra.mxu0 0.0
        %2635 = vmatprep.subr.mxu0 0.0
        %2636 = vmatpush1.msra.mxu0 0.0
        %2637 = vmatprep.subr.mxu0 0.0
        %2638 = vmatpush1.msra.mxu0 0.0
        %2639 = vmatprep.subr.mxu0 0.0
        %2640 = vmatpush1.msra.mxu0 0.0
        %2641 = vmatprep.subr.mxu0 0.0
        %2642 = vmatpush1.msra.mxu0 0.0
        %2643 = vmatprep.subr.mxu0 0.0
        %2644 = vmatpush1.msra.mxu0 0.0
        %2645 = vmatprep.subr.mxu0 0.0
        %2646 = vmatpush1.msra.mxu0 0.0
        %2647 = vmatprep.subr.mxu0 0.0
        %2648 = vmatpush1.msra.mxu0 0.0
        %2649 = vmatprep.subr.mxu0 0.0
        %2650 = vmatpush1.msra.mxu0 0.0
        %2651 = vmatprep.subr.mxu0 0.0
        %2652 = vmatpush1.msra.mxu0 0.0
        %2653 = vmatprep.subr.mxu0 0.0
        %2654 = vmatpush1.msra.mxu0 0.0
        %2655 = vmatprep.subr.mxu0 0.0
        %2656 = vmatpush1.msra.mxu0 0.0
        %2657 = vmatprep.subr.mxu0 0.0
        %2658 = vmatpush1.msra.mxu0 0.0
        %2659 = vmatprep.subr.mxu0 0.0
        %2660 = vmatpush1.msra.mxu0 0.0
        %2661 = vmatprep.subr.mxu0 0.0
        %2662 = vmatpush1.msra.mxu0 0.0
        %2663 = vmatprep.subr.mxu0 0.0
        %2664 = vmatpush1.msra.mxu0 0.0
        %2665 = vmatprep.subr.mxu0 0.0
        %2666 = vmatpush1.msra.mxu0 0.0
        %2667 = vmatprep.subr.mxu0 0.0
        %2668 = vmatpush1.msra.mxu0 0.0
        %2669 = vmatprep.subr.mxu0 0.0
        %2670 = vmatpush1.msra.mxu0 0.0
        %2671 = vmatprep.subr.mxu0 0.0
        %2672 = vmatpush1.msra.mxu0 0.0
        %2673 = vmatprep.subr.mxu0 0.0
        %2674 = vmatpush1.msra.mxu0 0.0
        %2675 = vmatprep.subr.mxu0 0.0
        %2676 = vmatpush1.msra.mxu0 0.0
        %2677 = vmatprep.subr.mxu0 0.0
        %2678 = vmatpush1.msra.mxu0 0.0
        %2679 = vmatprep.mubr.f32.mxu0 0.0
        %2680 = vmatmul.mubr.f32.gmra.mrb[0].mxu0 %v2600
        %v2681 = vpop.f32.mrb[0].mxu0
        %v2682 = vadd.f32 0.0, %v2681
        %v2683 = vpop.f32.mrb[0].mxu0
        %2684 = vmatprep.mubr.f32.mxu0 0.0
        %2685 = vmatmul.mubr.f32.gmra.mrb[0].mxu0 %v2603
        %v2686 = vpop.f32.mrb[0].mxu0
        %v2687 = vadd.f32 0.0, %v2686
        %v2688 = vpop.f32.mrb[0].mxu0
        %2689 = vmatprep.mubr.f32.mxu0 0.0
        %2690 = vmatmul.mubr.f32.gmra.mrb[0].mxu0 %v2606
        %v2691 = vpop.f32.mrb[0].mxu0
        %v2692 = vadd.f32 0.0, %v2691
        %v2693 = vpop.f32.mrb[0].mxu0
        %2694 = vmatprep.mubr.f32.mxu0 0.0
        %2695 = vmatmul.mubr.f32.gmra.mrb[0].mxu0 %v2609
        %v2696 = vpop.f32.mrb[0].mxu0
        %v2697 = vadd.f32 0.0, %v2696
        %v2698 = vpop.f32.mrb[0].mxu0
        %2699 = vdwg.mxu0
        %v2700 = vxor.u32 %v2682, 2147483648
        %v2701 = vxor.u32 %v2687, 2147483648
        %v2702 = vxor.u32 %v2692, 2147483648
        %v2703 = vxor.u32 %v2697, 2147483648
        %v2704 = vmul.f32 %v2700, 1.442695
        %v2705 = vpow.pop %v2704
        %v2706 = vmul.f32 %v2701, 1.442695
        %v2707 = vpow.pop %v2706
        %v2708 = vmul.f32 %v2702, 1.442695
        %v2709 = vpow.pop %v2708
        %v2710 = vmul.f32 %v2703, 1.442695
        %v2711 = vpow.pop %v2710
        %v2712 = vadd.f32 %v2705, 1.0
        %v2713 = vadd.f32 %v2707, 1.0
        %v2714 = vadd.f32 %v2709, 1.0
        %v2715 = vadd.f32 %v2711, 1.0
        %v2716 = vrcp.pop %v2712
        %v2717 = vmul.f32 1.0, %v2716
        %v2718 = vrcp.pop %v2713
        %v2719 = vmul.f32 1.0, %v2718
        %v2720 = vrcp.pop %v2714
        %v2721 = vmul.f32 1.0, %v2720
        %v2722 = vrcp.pop %v2715
        %v2723 = vmul.f32 1.0, %v2722
        %2725 = vset.pattern.permute.xlu0 0
        %2726 = vperm.xlu0 %2725, %v2717
        %v2727 = vpop.permute.xlu0 %2726
        %2730 = vset.pattern.permute.xlu0 0
        %2731 = vperm.xlu0 %2730, %v2719
        %v2732 = vpop.permute.xlu0 %2731
        %2735 = vset.pattern.permute.xlu0 0
        %2736 = vperm.xlu0 %2735, %v2721
        %v2737 = vpop.permute.xlu0 %2736
        %2740 = vset.pattern.permute.xlu0 0
        %2741 = vperm.xlu0 %2740, %v2723
        %v2742 = vpop.permute.xlu0 %2741
        %v2744 = vmul.f32 %v2496, %v2727
        %v2745 = vmul.f32 %v2497, %v2727
        %v2746 = vmul.f32 %v2494, %v2732
        %v2747 = vmul.f32 %v2495, %v2732
        %v2748 = vmul.f32 %v2498, %v2737
        %v2749 = vmul.f32 %v2499, %v2737
        %v2750 = vmul.f32 %v2500, %v2742
        %v2751 = vmul.f32 %v2501, %v2742
        %2752 = vst [vmem:[%s474] sm:$0xff] %v2744
        %2753 = vst [vmem:[%s474 + $0x8] sm:$0xff] %v2745
        %2754 = vst [vmem:[%s474 + $0x10] sm:$0xff] %v2746
        %2755 = vst [vmem:[%s474 + $0x18] sm:$0xff] %v2747
        %2756 = vst [vmem:[%s474 + $0x20] sm:$0xff] %v2748
        %2757 = vst [vmem:[%s474 + $0x28] sm:$0xff] %v2749
        %2758 = vst [vmem:[%s474 + $0x30] sm:$0xff] %v2750
        %2759 = vst [vmem:[%s474 + $0x38] sm:$0xff] %v2751
        %s2760 = sand.u32 %s309, 1
        %s2761 = scalar_lea.sflag [#allocation4], %s2760
        %s2762 = sand.u32 %s309, 1
        %s2763 = smul.addr %s2762, 64
        %s2764 = scalar_lea.vmem [#allocation5], %s2763
        // Predicated region
        $region73: #{tpu_custom_call.1} parent=67 // pred_check
          %p2765 = pneg %p319
        $region74: #{tpu_custom_call.1} parent=67 // pred_check_branch
          %2767 = sbr.rel (%p2765) target = $region76
        $region75: #{tpu_custom_call.1} parent=67 // pred_region
          %s2769 = ssub.s32 1024, 1024
          %2770 = vsyncadd %s2761, %s2769
          %s2771 = smul.addr %s29, 8
          %s2772 = smul.addr %s2771, 128
          %s2773 = scalar_lea.hbm %s12, %s2772
          %s2774 = sshll.u32 %s2764, 4
          %s2775 = int_to_ptr.vmem [resolvable:$true] %s2774
          %2780 = dma.vmem_to_hbm [thread:$0]  %s2775, 1024, %s2773, %s2761, 256, 256, 16
        $region76: #{tpu_custom_call.1} parent=67 // pred_fallthru
          _
      $region68: #{tpu_custom_call.1} parent=5 // pred_fallthru
        _
      %p2781 = scmp.le.s32.totalorder 2, %s24
      // Predicated region
      $region77: #{tpu_custom_call.1} parent=5 // pred_check
        %p2782 = pneg %p2781
      $region78: #{tpu_custom_call.1} parent=5 // pred_check_branch
        %2784 = sbr.rel (%p2782) target = $region80
      $region79: #{tpu_custom_call.1} parent=5 // pred_region
        %s2785 = ssub.s32 %s24, 2
        // Predicated region
        $region81: #{tpu_custom_call.1} parent=79 // pred_check
          %p2786 = pneg %p325
        $region82: #{tpu_custom_call.1} parent=79 // pred_check_branch
          %2788 = sbr.rel (%p2786) target = $region84
        $region83: #{tpu_custom_call.1} parent=79 // pred_region
          %s2789 = sand.u32 %s310, 1
          %s2790 = scalar_lea.sflag [#allocation4], %s2789
          %s2791 = sand.u32 %s310, 1
          %s2792 = smul.addr %s2791, 64
          %s2793 = scalar_lea.vmem [#allocation5], %s2792
          %2794 = dma.done %s2790, 1024
        $region84: #{tpu_custom_call.1} parent=79 // pred_fallthru
          _
      $region80: #{tpu_custom_call.1} parent=5 // pred_fallthru
        _
    $region6: #{tpu_custom_call.1} parent=1 // loop_footer
      %s28 = sadd.s32 1, %s24
    $region7: #{tpu_custom_call.1} parent=1 // loop_footer_branch
      %23 = sbr.rel target = $region3
    $region8: #{tpu_custom_call.1} parent=1 // loop_exit
      _
    %2795 = vsyncpa [#allocation3], 1
    %s2796 = scalar_lea.sflag [#allocation3], 1
    %2797 = vsyncpa %s2796, 1
    %2798 = vsyncpa [#allocation4], 1
    %s2799 = scalar_lea.sflag [#allocation4], 1
    %2800 = vsyncpa %s2799, 1

</llo_original>
